<compile_context>
chip_gen: v7x
topology: tpu7x:2x2x1
jax: 0.10.0
libtpu: 0.0.40
codegen_flags: <defaults>
</compile_context>

<pallas_src>
import functools
import math

import jax
import jax.numpy as jnp
from jax import lax
from jax.experimental import pallas as pl
from jax.experimental.pallas import tpu as pltpu

_HI = jax.lax.Precision.HIGHEST


# ----------------------------------------------------------------------------
# Fused TransformerLayer kernel (single grid step, everything in VMEM).
# ----------------------------------------------------------------------------
def transformer_layer_kernel(x_ref, wqkv_ref, bqkv_ref, wo_ref, bo_ref,
                             wmlp_ref, o_ref, *, num_heads):
    # x_ref:    (L, N, C)   input in PyTorch (seq, batch, embed) layout
    # wqkv_ref: (C, 3C)     pre-composed [Wq.T@Wiq.T | Wk.T@Wik.T | Wv.T@Wiv.T]
    # bqkv_ref: (1, 3C)     MHA in_proj bias
    # wo_ref:   (C, C)      out_proj.weight.T
    # bo_ref:   (1, C)      out_proj.bias
    # wmlp_ref: (C, C)      pre-composed fc1.weight.T @ fc2.weight.T
    # o_ref:    (L, N, C)
    L, N, C = x_ref.shape
    hd = C // num_heads
    scale = 1.0 / math.sqrt(hd)

    wqkv = wqkv_ref[...]
    bqkv = bqkv_ref[...]
    wo = wo_ref[...]
    bo = bo_ref[...]
    wmlp = wmlp_ref[...]

    for n in range(N):                     # static unroll over (tiny) batch
        x = x_ref[:, n, :]                                           # (L, C)
        qkv = jnp.dot(x, wqkv, preferred_element_type=jnp.float32) + bqkv

        head_outs = []
        for h in range(num_heads):         # static unroll over heads
            lo = h * hd
            qh = qkv[:, lo:lo + hd] * scale                          # (L, hd)
            kh = qkv[:, C + lo:C + lo + hd]
            vh = qkv[:, 2 * C + lo:2 * C + lo + hd]
            # scores = qh @ kh.T  (contract on the head dim, no explicit .T)
            s = lax.dot_general(qh, kh, (((1,), (1,)), ((), ())),
                                preferred_element_type=jnp.float32)  # (L, L)
            s = s - jnp.max(s, axis=-1, keepdims=True)
            p = jnp.exp(s)
            p = p / jnp.sum(p, axis=-1, keepdims=True)
            head_outs.append(
                jnp.dot(p, vh, preferred_element_type=jnp.float32))  # (L, hd)

        attn = jnp.concatenate(head_outs, axis=-1)                   # (L, C)
        attn_out = jnp.dot(attn, wo, preferred_element_type=jnp.float32) + bo
        x1 = attn_out + x                                            # residual 1
        y = jnp.dot(x1, wmlp, preferred_element_type=jnp.float32) + x1  # MLP + residual 2
        o_ref[:, n, :] = y


def transformer_layer_pallas(x, wqkv, bqkv, wo, bo, wmlp, *, num_heads):
    L, N, C = x.shape
    kernel = functools.partial(transformer_layer_kernel, num_heads=num_heads)
    return pl.pallas_call(
        kernel,
        out_shape=jax.ShapeDtypeStruct((L, N, C), jnp.float32),
        grid=(1,),
        in_specs=[
            pl.BlockSpec((L, N, C), lambda i: (0, 0, 0)),
            pl.BlockSpec((C, 3 * C), lambda i: (0, 0)),
            pl.BlockSpec((1, 3 * C), lambda i: (0, 0)),
            pl.BlockSpec((C, C), lambda i: (0, 0)),
            pl.BlockSpec((1, C), lambda i: (0, 0)),
            pl.BlockSpec((C, C), lambda i: (0, 0)),
        ],
        out_specs=pl.BlockSpec((L, N, C), lambda i: (0, 0, 0)),
        compiler_params=pltpu.CompilerParams(
            dimension_semantics=("arbitrary",)),
    )(x, wqkv, bqkv.reshape(1, 3 * C), wo, bo.reshape(1, C), wmlp)


# ----------------------------------------------------------------------------
# Wrapper: fold the PyTorch-style parameters into the fused kernel operands.
# ----------------------------------------------------------------------------
@functools.partial(jax.jit, static_argnames=("num_heads",))
def transformer_layer_forward(x, params, *, num_heads):
    C = x.shape[-1]
    wi = params["in_proj_w"]          # (3C, C)
    bi = params["in_proj_b"]          # (3C,)
    mm = lambda a, b: jnp.matmul(a, b, precision=_HI)
    # fold q/k/v Linears (no bias) into the MHA in_proj, concat along cout
    wqkv = jnp.concatenate(
        [mm(params["wq"].T, wi[:C].T),
         mm(params["wk"].T, wi[C:2 * C].T),
         mm(params["wv"].T, wi[2 * C:].T)], axis=1)                  # (C, 3C)
    wo = params["out_proj_w"].T                                      # (C, C)
    wmlp = mm(params["fc1_w"].T, params["fc2_w"].T)                  # (C, C)
    return transformer_layer_pallas(
        x.astype(jnp.float32), wqkv, bi, wo, params["out_proj_b"], wmlp,
        num_heads=num_heads)


# ----------------------------------------------------------------------------
# Parameters (PyTorch layout: Linear weight is (out, in), applied as x @ W.T).
# ----------------------------------------------------------------------------
def init_params(key, c):
    ks = jax.random.split(key, 9)
    s = 1.0 / math.sqrt(c)
    w = lambda k, shape: s * jax.random.normal(k, shape, jnp.float32)
    return dict(
        wq=w(ks[0], (c, c)),
        wk=w(ks[1], (c, c)),
        wv=w(ks[2], (c, c)),
        in_proj_w=w(ks[3], (3 * c, c)),
        in_proj_b=0.1 * jax.random.normal(ks[4], (3 * c,), jnp.float32),
        out_proj_w=w(ks[5], (c, c)),
        out_proj_b=0.1 * jax.random.normal(ks[6], (c,), jnp.float32),
        fc1_w=w(ks[7], (c, c)),
        fc2_w=w(ks[8], (c, c)),
    )


# ----------------------------------------------------------------------------
# Pure-JAX reference (mirrors torch.nn.MultiheadAttention, eval mode).
# ----------------------------------------------------------------------------
def reference_forward(x, params, num_heads):
    L, N, C = x.shape
    hd = C // num_heads
    scale = 1.0 / math.sqrt(hd)
    mm = lambda a, b: jnp.matmul(a, b, precision=_HI)

    q = mm(x, params["wq"].T)
    k = mm(x, params["wk"].T)
    v = mm(x, params["wv"].T)
    wi, bi = params["in_proj_w"], params["in_proj_b"]
    q2 = (mm(q, wi[:C].T) + bi[:C]) * scale
    k2 = mm(k, wi[C:2 * C].T) + bi[C:2 * C]
    v2 = mm(v, wi[2 * C:].T) + bi[2 * C:]

    def split_heads(t):                      # (L, N, C) -> (N*H, L, hd), torch layout
        return t.reshape(L, N * num_heads, hd).transpose(1, 0, 2)

    qh, kh, vh = split_heads(q2), split_heads(k2), split_heads(v2)
    s = jnp.einsum("bqd,bkd->bqk", qh, kh, precision=_HI)
    p = jax.nn.softmax(s, axis=-1)
    o = jnp.einsum("bqk,bkd->bqd", p, vh, precision=_HI)
    o = o.transpose(1, 0, 2).reshape(L, N, C)
    o = mm(o, params["out_proj_w"].T) + params["out_proj_b"]
    x1 = o + x
    return mm(mm(x1, params["fc1_w"].T), params["fc2_w"].T) + x1


if __name__ == "__main__":
    # Small config consistent with TransformerLayer(c, num_heads):
    #   seq L=8, batch N=2, embed c=32, num_heads=4 (head_dim=8).
    L, N, C, NUM_HEADS = 8, 2, 32, 4

    key = jax.random.PRNGKey(0)
    kx, kp = jax.random.split(key)
    x = jax.random.normal(kx, (L, N, C), jnp.float32)   # (seq, batch, embed)
    params = init_params(kp, C)

    out = jax.block_until_ready(
        transformer_layer_forward(x, params, num_heads=NUM_HEADS))
    ref = jax.block_until_ready(reference_forward(x, params, NUM_HEADS))

    assert out.shape == (L, N, C), out.shape
    max_err = float(jnp.max(jnp.abs(out - ref)))
    assert jnp.allclose(out, ref, atol=5e-4, rtol=5e-4), max_err

    print("KERNEL_OK")
</pallas_src>

<mosaic_0001>
module attributes {stable_mosaic.version = 11 : i64} {
  func.func @transformer_layer_kernel(%arg0: i32, %arg1: memref<8x2x32xf32, #tpu.memory_space<vmem>>, %arg2: memref<32x96xf32, #tpu.memory_space<vmem>>, %arg3: memref<1x96xf32, #tpu.memory_space<vmem>>, %arg4: memref<32x32xf32, #tpu.memory_space<vmem>>, %arg5: memref<1x32xf32, #tpu.memory_space<vmem>>, %arg6: memref<32x32xf32, #tpu.memory_space<vmem>>, %arg7: memref<8x2x32xf32, #tpu.memory_space<vmem>>) attributes {dimension_semantics = [#tpu.dimension_semantics<arbitrary>], iteration_bounds = array<i64: 1>, scalar_prefetch = 0 : i64, scratch_operands = 0 : i64, tpu.core_type = #tpu.core_type<tc>, window_params = [{pipeline_mode = #tpu.pipeline_mode<synchronous>, transform_indices = @transform_0, window_bounds = array<i64: 8, 2, 32>}, {pipeline_mode = #tpu.pipeline_mode<synchronous>, transform_indices = @transform_1, window_bounds = array<i64: 32, 96>}, {pipeline_mode = #tpu.pipeline_mode<synchronous>, transform_indices = @transform_2, window_bounds = array<i64: 1, 96>}, {pipeline_mode = #tpu.pipeline_mode<synchronous>, transform_indices = @transform_3, window_bounds = array<i64: 32, 32>}, {pipeline_mode = #tpu.pipeline_mode<synchronous>, transform_indices = @transform_4, window_bounds = array<i64: 1, 32>}, {pipeline_mode = #tpu.pipeline_mode<synchronous>, transform_indices = @transform_5, window_bounds = array<i64: 32, 32>}, {pipeline_mode = #tpu.pipeline_mode<synchronous>, transform_indices = @transform_6, window_bounds = array<i64: 8, 2, 32>}]} {
    %c0 = arith.constant 0 : index
    %c0_0 = arith.constant 0 : index
    %0 = vector.load %arg2[%c0, %c0_0] : memref<32x96xf32, #tpu.memory_space<vmem>>, vector<32x96xf32>
    %c0_1 = arith.constant 0 : index
    %c0_2 = arith.constant 0 : index
    %1 = vector.load %arg3[%c0_1, %c0_2] : memref<1x96xf32, #tpu.memory_space<vmem>>, vector<1x96xf32>
    %c0_3 = arith.constant 0 : index
    %c0_4 = arith.constant 0 : index
    %2 = vector.load %arg4[%c0_3, %c0_4] : memref<32x32xf32, #tpu.memory_space<vmem>>, vector<32x32xf32>
    %c0_5 = arith.constant 0 : index
    %c0_6 = arith.constant 0 : index
    %3 = vector.load %arg5[%c0_5, %c0_6] : memref<1x32xf32, #tpu.memory_space<vmem>>, vector<1x32xf32>
    %c0_7 = arith.constant 0 : index
    %c0_8 = arith.constant 0 : index
    %4 = vector.load %arg6[%c0_7, %c0_8] : memref<32x32xf32, #tpu.memory_space<vmem>>, vector<32x32xf32>
    %c0_9 = arith.constant 0 : index
    %c0_10 = arith.constant 0 : index
    %c0_11 = arith.constant 0 : index
    %5 = vector.load %arg1[%c0_9, %c0_10, %c0_11] : memref<8x2x32xf32, #tpu.memory_space<vmem>>, vector<8x1x32xf32>
    %6 = vector.shape_cast %5 : vector<8x1x32xf32> to vector<8x32xf32>
    %cst = arith.constant dense<0.000000e+00> : vector<8x96xf32>
    %7 = tpu.matmul %6, %0, %cst {dimension_numbers = #tpu.dot_dimension_numbers<[1], [0], [0], [1], [0, 0, 1, 1], [], []>} : vector<8x32xf32>, vector<32x96xf32>, vector<8x96xf32> -> vector<8x96xf32>
    %8 = vector.broadcast %1 : vector<1x96xf32> to vector<8x96xf32>
    %9 = arith.addf %7, %8 : vector<8x96xf32>
    %10 = vector.extract_strided_slice %9 {offsets = [0, 0], sizes = [8, 8], strides = [1, 1]} : vector<8x96xf32> to vector<8x8xf32>
    %cst_12 = arith.constant 0.353553385 : f32
    %11 = vector.broadcast %cst_12 : f32 to vector<8x8xf32>
    %12 = arith.mulf %10, %11 : vector<8x8xf32>
    %13 = vector.extract_strided_slice %9 {offsets = [0, 32], sizes = [8, 8], strides = [1, 1]} : vector<8x96xf32> to vector<8x8xf32>
    %14 = vector.extract_strided_slice %9 {offsets = [0, 64], sizes = [8, 8], strides = [1, 1]} : vector<8x96xf32> to vector<8x8xf32>
    %cst_13 = arith.constant dense<0.000000e+00> : vector<8x8xf32>
    %15 = tpu.matmul %12, %13, %cst_13 {dimension_numbers = #tpu.dot_dimension_numbers<[1], [1], [0], [0], [0, 0, 1, 0], [], []>} : vector<8x8xf32>, vector<8x8xf32>, vector<8x8xf32> -> vector<8x8xf32>
    %cst_14 = arith.constant dense<0xFF800000> : vector<8xf32>
    %16 = vector.multi_reduction <maximumf>, %15, %cst_14 [1] : vector<8x8xf32> to vector<8xf32>
    %17 = vector.shape_cast %16 : vector<8xf32> to vector<8x1xf32>
    %18 = vector.broadcast %17 : vector<8x1xf32> to vector<8x8xf32>
    %19 = arith.subf %15, %18 : vector<8x8xf32>
    %20 = math.exp %19 : vector<8x8xf32>
    %cst_15 = arith.constant dense<0.000000e+00> : vector<8xf32>
    %21 = vector.multi_reduction <add>, %20, %cst_15 [1] : vector<8x8xf32> to vector<8xf32>
    %22 = vector.shape_cast %21 : vector<8xf32> to vector<8x1xf32>
    %23 = vector.broadcast %22 : vector<8x1xf32> to vector<8x8xf32>
    %24 = arith.divf %20, %23 : vector<8x8xf32>
    %cst_16 = arith.constant dense<0.000000e+00> : vector<8x8xf32>
    %25 = tpu.matmul %24, %14, %cst_16 {dimension_numbers = #tpu.dot_dimension_numbers<[1], [0], [0], [1], [0, 0, 1, 1], [], []>} : vector<8x8xf32>, vector<8x8xf32>, vector<8x8xf32> -> vector<8x8xf32>
    %26 = vector.extract_strided_slice %9 {offsets = [0, 8], sizes = [8, 8], strides = [1, 1]} : vector<8x96xf32> to vector<8x8xf32>
    %cst_17 = arith.constant 0.353553385 : f32
    %27 = vector.broadcast %cst_17 : f32 to vector<8x8xf32>
    %28 = arith.mulf %26, %27 : vector<8x8xf32>
    %29 = vector.extract_strided_slice %9 {offsets = [0, 40], sizes = [8, 8], strides = [1, 1]} : vector<8x96xf32> to vector<8x8xf32>
    %30 = vector.extract_strided_slice %9 {offsets = [0, 72], sizes = [8, 8], strides = [1, 1]} : vector<8x96xf32> to vector<8x8xf32>
    %cst_18 = arith.constant dense<0.000000e+00> : vector<8x8xf32>
    %31 = tpu.matmul %28, %29, %cst_18 {dimension_numbers = #tpu.dot_dimension_numbers<[1], [1], [0], [0], [0, 0, 1, 0], [], []>} : vector<8x8xf32>, vector<8x8xf32>, vector<8x8xf32> -> vector<8x8xf32>
    %cst_19 = arith.constant dense<0xFF800000> : vector<8xf32>
    %32 = vector.multi_reduction <maximumf>, %31, %cst_19 [1] : vector<8x8xf32> to vector<8xf32>
    %33 = vector.shape_cast %32 : vector<8xf32> to vector<8x1xf32>
    %34 = vector.broadcast %33 : vector<8x1xf32> to vector<8x8xf32>
    %35 = arith.subf %31, %34 : vector<8x8xf32>
    %36 = math.exp %35 : vector<8x8xf32>
    %cst_20 = arith.constant dense<0.000000e+00> : vector<8xf32>
    %37 = vector.multi_reduction <add>, %36, %cst_20 [1] : vector<8x8xf32> to vector<8xf32>
    %38 = vector.shape_cast %37 : vector<8xf32> to vector<8x1xf32>
    %39 = vector.broadcast %38 : vector<8x1xf32> to vector<8x8xf32>
    %40 = arith.divf %36, %39 : vector<8x8xf32>
    %cst_21 = arith.constant dense<0.000000e+00> : vector<8x8xf32>
    %41 = tpu.matmul %40, %30, %cst_21 {dimension_numbers = #tpu.dot_dimension_numbers<[1], [0], [0], [1], [0, 0, 1, 1], [], []>} : vector<8x8xf32>, vector<8x8xf32>, vector<8x8xf32> -> vector<8x8xf32>
    %42 = vector.extract_strided_slice %9 {offsets = [0, 16], sizes = [8, 8], strides = [1, 1]} : vector<8x96xf32> to vector<8x8xf32>
    %cst_22 = arith.constant 0.353553385 : f32
    %43 = vector.broadcast %cst_22 : f32 to vector<8x8xf32>
    %44 = arith.mulf %42, %43 : vector<8x8xf32>
    %45 = vector.extract_strided_slice %9 {offsets = [0, 48], sizes = [8, 8], strides = [1, 1]} : vector<8x96xf32> to vector<8x8xf32>
    %46 = vector.extract_strided_slice %9 {offsets = [0, 80], sizes = [8, 8], strides = [1, 1]} : vector<8x96xf32> to vector<8x8xf32>
    %cst_23 = arith.constant dense<0.000000e+00> : vector<8x8xf32>
    %47 = tpu.matmul %44, %45, %cst_23 {dimension_numbers = #tpu.dot_dimension_numbers<[1], [1], [0], [0], [0, 0, 1, 0], [], []>} : vector<8x8xf32>, vector<8x8xf32>, vector<8x8xf32> -> vector<8x8xf32>
    %cst_24 = arith.constant dense<0xFF800000> : vector<8xf32>
    %48 = vector.multi_reduction <maximumf>, %47, %cst_24 [1] : vector<8x8xf32> to vector<8xf32>
    %49 = vector.shape_cast %48 : vector<8xf32> to vector<8x1xf32>
    %50 = vector.broadcast %49 : vector<8x1xf32> to vector<8x8xf32>
    %51 = arith.subf %47, %50 : vector<8x8xf32>
    %52 = math.exp %51 : vector<8x8xf32>
    %cst_25 = arith.constant dense<0.000000e+00> : vector<8xf32>
    %53 = vector.multi_reduction <add>, %52, %cst_25 [1] : vector<8x8xf32> to vector<8xf32>
    %54 = vector.shape_cast %53 : vector<8xf32> to vector<8x1xf32>
    %55 = vector.broadcast %54 : vector<8x1xf32> to vector<8x8xf32>
    %56 = arith.divf %52, %55 : vector<8x8xf32>
    %cst_26 = arith.constant dense<0.000000e+00> : vector<8x8xf32>
    %57 = tpu.matmul %56, %46, %cst_26 {dimension_numbers = #tpu.dot_dimension_numbers<[1], [0], [0], [1], [0, 0, 1, 1], [], []>} : vector<8x8xf32>, vector<8x8xf32>, vector<8x8xf32> -> vector<8x8xf32>
    %58 = vector.extract_strided_slice %9 {offsets = [0, 24], sizes = [8, 8], strides = [1, 1]} : vector<8x96xf32> to vector<8x8xf32>
    %cst_27 = arith.constant 0.353553385 : f32
    %59 = vector.broadcast %cst_27 : f32 to vector<8x8xf32>
    %60 = arith.mulf %58, %59 : vector<8x8xf32>
    %61 = vector.extract_strided_slice %9 {offsets = [0, 56], sizes = [8, 8], strides = [1, 1]} : vector<8x96xf32> to vector<8x8xf32>
    %62 = vector.extract_strided_slice %9 {offsets = [0, 88], sizes = [8, 8], strides = [1, 1]} : vector<8x96xf32> to vector<8x8xf32>
    %cst_28 = arith.constant dense<0.000000e+00> : vector<8x8xf32>
    %63 = tpu.matmul %60, %61, %cst_28 {dimension_numbers = #tpu.dot_dimension_numbers<[1], [1], [0], [0], [0, 0, 1, 0], [], []>} : vector<8x8xf32>, vector<8x8xf32>, vector<8x8xf32> -> vector<8x8xf32>
    %cst_29 = arith.constant dense<0xFF800000> : vector<8xf32>
    %64 = vector.multi_reduction <maximumf>, %63, %cst_29 [1] : vector<8x8xf32> to vector<8xf32>
    %65 = vector.shape_cast %64 : vector<8xf32> to vector<8x1xf32>
    %66 = vector.broadcast %65 : vector<8x1xf32> to vector<8x8xf32>
    %67 = arith.subf %63, %66 : vector<8x8xf32>
    %68 = math.exp %67 : vector<8x8xf32>
    %cst_30 = arith.constant dense<0.000000e+00> : vector<8xf32>
    %69 = vector.multi_reduction <add>, %68, %cst_30 [1] : vector<8x8xf32> to vector<8xf32>
    %70 = vector.shape_cast %69 : vector<8xf32> to vector<8x1xf32>
    %71 = vector.broadcast %70 : vector<8x1xf32> to vector<8x8xf32>
    %72 = arith.divf %68, %71 : vector<8x8xf32>
    %cst_31 = arith.constant dense<0.000000e+00> : vector<8x8xf32>
    %73 = tpu.matmul %72, %62, %cst_31 {dimension_numbers = #tpu.dot_dimension_numbers<[1], [0], [0], [1], [0, 0, 1, 1], [], []>} : vector<8x8xf32>, vector<8x8xf32>, vector<8x8xf32> -> vector<8x8xf32>
    %74 = tpu.concatenate %25, %41, %57, %73 in 1 : vector<8x8xf32>, vector<8x8xf32>, vector<8x8xf32>, vector<8x8xf32> -> vector<8x32xf32>
    %cst_32 = arith.constant dense<0.000000e+00> : vector<8x32xf32>
    %75 = tpu.matmul %74, %2, %cst_32 {dimension_numbers = #tpu.dot_dimension_numbers<[1], [0], [0], [1], [0, 0, 1, 1], [], []>} : vector<8x32xf32>, vector<32x32xf32>, vector<8x32xf32> -> vector<8x32xf32>
    %76 = vector.broadcast %3 : vector<1x32xf32> to vector<8x32xf32>
    %77 = arith.addf %75, %76 : vector<8x32xf32>
    %78 = arith.addf %77, %6 : vector<8x32xf32>
    %cst_33 = arith.constant dense<0.000000e+00> : vector<8x32xf32>
    %79 = tpu.matmul %78, %4, %cst_33 {dimension_numbers = #tpu.dot_dimension_numbers<[1], [0], [0], [1], [0, 0, 1, 1], [], []>} : vector<8x32xf32>, vector<32x32xf32>, vector<8x32xf32> -> vector<8x32xf32>
    %80 = arith.addf %79, %78 : vector<8x32xf32>
    %c0_34 = arith.constant 0 : index
    %c0_35 = arith.constant 0 : index
    %c0_36 = arith.constant 0 : index
    %81 = vector.load %arg7[%c0_34, %c0_35, %c0_36] : memref<8x2x32xf32, #tpu.memory_space<vmem>>, vector<8x1x32xf32>
    %82 = vector.shape_cast %81 : vector<8x1x32xf32> to vector<8x32xf32>
    %83 = vector.shape_cast %80 : vector<8x32xf32> to vector<8x1x32xf32>
    tpu.vector_store %arg7[%c0_34, %c0_35, %c0_36], %83 {strides = array<i32>} : memref<8x2x32xf32, #tpu.memory_space<vmem>>, vector<8x1x32xf32>,
    %c0_37 = arith.constant 0 : index
    %c1 = arith.constant 1 : index
    %c0_38 = arith.constant 0 : index
    %84 = vector.load %arg1[%c0_37, %c1, %c0_38] : memref<8x2x32xf32, #tpu.memory_space<vmem>>, vector<8x1x32xf32>
    %85 = vector.shape_cast %84 : vector<8x1x32xf32> to vector<8x32xf32>
    %cst_39 = arith.constant dense<0.000000e+00> : vector<8x96xf32>
    %86 = tpu.matmul %85, %0, %cst_39 {dimension_numbers = #tpu.dot_dimension_numbers<[1], [0], [0], [1], [0, 0, 1, 1], [], []>} : vector<8x32xf32>, vector<32x96xf32>, vector<8x96xf32> -> vector<8x96xf32>
    %87 = vector.broadcast %1 : vector<1x96xf32> to vector<8x96xf32>
    %88 = arith.addf %86, %87 : vector<8x96xf32>
    %89 = vector.extract_strided_slice %88 {offsets = [0, 0], sizes = [8, 8], strides = [1, 1]} : vector<8x96xf32> to vector<8x8xf32>
    %cst_40 = arith.constant 0.353553385 : f32
    %90 = vector.broadcast %cst_40 : f32 to vector<8x8xf32>
    %91 = arith.mulf %89, %90 : vector<8x8xf32>
    %92 = vector.extract_strided_slice %88 {offsets = [0, 32], sizes = [8, 8], strides = [1, 1]} : vector<8x96xf32> to vector<8x8xf32>
    %93 = vector.extract_strided_slice %88 {offsets = [0, 64], sizes = [8, 8], strides = [1, 1]} : vector<8x96xf32> to vector<8x8xf32>
    %cst_41 = arith.constant dense<0.000000e+00> : vector<8x8xf32>
    %94 = tpu.matmul %91, %92, %cst_41 {dimension_numbers = #tpu.dot_dimension_numbers<[1], [1], [0], [0], [0, 0, 1, 0], [], []>} : vector<8x8xf32>, vector<8x8xf32>, vector<8x8xf32> -> vector<8x8xf32>
    %cst_42 = arith.constant dense<0xFF800000> : vector<8xf32>
    %95 = vector.multi_reduction <maximumf>, %94, %cst_42 [1] : vector<8x8xf32> to vector<8xf32>
    %96 = vector.shape_cast %95 : vector<8xf32> to vector<8x1xf32>
    %97 = vector.broadcast %96 : vector<8x1xf32> to vector<8x8xf32>
    %98 = arith.subf %94, %97 : vector<8x8xf32>
    %99 = math.exp %98 : vector<8x8xf32>
    %cst_43 = arith.constant dense<0.000000e+00> : vector<8xf32>
    %100 = vector.multi_reduction <add>, %99, %cst_43 [1] : vector<8x8xf32> to vector<8xf32>
    %101 = vector.shape_cast %100 : vector<8xf32> to vector<8x1xf32>
    %102 = vector.broadcast %101 : vector<8x1xf32> to vector<8x8xf32>
    %103 = arith.divf %99, %102 : vector<8x8xf32>
    %cst_44 = arith.constant dense<0.000000e+00> : vector<8x8xf32>
    %104 = tpu.matmul %103, %93, %cst_44 {dimension_numbers = #tpu.dot_dimension_numbers<[1], [0], [0], [1], [0, 0, 1, 1], [], []>} : vector<8x8xf32>, vector<8x8xf32>, vector<8x8xf32> -> vector<8x8xf32>
    %105 = vector.extract_strided_slice %88 {offsets = [0, 8], sizes = [8, 8], strides = [1, 1]} : vector<8x96xf32> to vector<8x8xf32>
    %cst_45 = arith.constant 0.353553385 : f32
    %106 = vector.broadcast %cst_45 : f32 to vector<8x8xf32>
    %107 = arith.mulf %105, %106 : vector<8x8xf32>
    %108 = vector.extract_strided_slice %88 {offsets = [0, 40], sizes = [8, 8], strides = [1, 1]} : vector<8x96xf32> to vector<8x8xf32>
    %109 = vector.extract_strided_slice %88 {offsets = [0, 72], sizes = [8, 8], strides = [1, 1]} : vector<8x96xf32> to vector<8x8xf32>
    %cst_46 = arith.constant dense<0.000000e+00> : vector<8x8xf32>
    %110 = tpu.matmul %107, %108, %cst_46 {dimension_numbers = #tpu.dot_dimension_numbers<[1], [1], [0], [0], [0, 0, 1, 0], [], []>} : vector<8x8xf32>, vector<8x8xf32>, vector<8x8xf32> -> vector<8x8xf32>
    %cst_47 = arith.constant dense<0xFF800000> : vector<8xf32>
    %111 = vector.multi_reduction <maximumf>, %110, %cst_47 [1] : vector<8x8xf32> to vector<8xf32>
    %112 = vector.shape_cast %111 : vector<8xf32> to vector<8x1xf32>
    %113 = vector.broadcast %112 : vector<8x1xf32> to vector<8x8xf32>
    %114 = arith.subf %110, %113 : vector<8x8xf32>
    %115 = math.exp %114 : vector<8x8xf32>
    %cst_48 = arith.constant dense<0.000000e+00> : vector<8xf32>
    %116 = vector.multi_reduction <add>, %115, %cst_48 [1] : vector<8x8xf32> to vector<8xf32>
    %117 = vector.shape_cast %116 : vector<8xf32> to vector<8x1xf32>
    %118 = vector.broadcast %117 : vector<8x1xf32> to vector<8x8xf32>
    %119 = arith.divf %115, %118 : vector<8x8xf32>
    %cst_49 = arith.constant dense<0.000000e+00> : vector<8x8xf32>
    %120 = tpu.matmul %119, %109, %cst_49 {dimension_numbers = #tpu.dot_dimension_numbers<[1], [0], [0], [1], [0, 0, 1, 1], [], []>} : vector<8x8xf32>, vector<8x8xf32>, vector<8x8xf32> -> vector<8x8xf32>
    %121 = vector.extract_strided_slice %88 {offsets = [0, 16], sizes = [8, 8], strides = [1, 1]} : vector<8x96xf32> to vector<8x8xf32>
    %cst_50 = arith.constant 0.353553385 : f32
    %122 = vector.broadcast %cst_50 : f32 to vector<8x8xf32>
    %123 = arith.mulf %121, %122 : vector<8x8xf32>
    %124 = vector.extract_strided_slice %88 {offsets = [0, 48], sizes = [8, 8], strides = [1, 1]} : vector<8x96xf32> to vector<8x8xf32>
    %125 = vector.extract_strided_slice %88 {offsets = [0, 80], sizes = [8, 8], strides = [1, 1]} : vector<8x96xf32> to vector<8x8xf32>
    %cst_51 = arith.constant dense<0.000000e+00> : vector<8x8xf32>
    %126 = tpu.matmul %123, %124, %cst_51 {dimension_numbers = #tpu.dot_dimension_numbers<[1], [1], [0], [0], [0, 0, 1, 0], [], []>} : vector<8x8xf32>, vector<8x8xf32>, vector<8x8xf32> -> vector<8x8xf32>
    %cst_52 = arith.constant dense<0xFF800000> : vector<8xf32>
    %127 = vector.multi_reduction <maximumf>, %126, %cst_52 [1] : vector<8x8xf32> to vector<8xf32>
    %128 = vector.shape_cast %127 : vector<8xf32> to vector<8x1xf32>
    %129 = vector.broadcast %128 : vector<8x1xf32> to vector<8x8xf32>
    %130 = arith.subf %126, %129 : vector<8x8xf32>
    %131 = math.exp %130 : vector<8x8xf32>
    %cst_53 = arith.constant dense<0.000000e+00> : vector<8xf32>
    %132 = vector.multi_reduction <add>, %131, %cst_53 [1] : vector<8x8xf32> to vector<8xf32>
    %133 = vector.shape_cast %132 : vector<8xf32> to vector<8x1xf32>
    %134 = vector.broadcast %133 : vector<8x1xf32> to vector<8x8xf32>
    %135 = arith.divf %131, %134 : vector<8x8xf32>
    %cst_54 = arith.constant dense<0.000000e+00> : vector<8x8xf32>
    %136 = tpu.matmul %135, %125, %cst_54 {dimension_numbers = #tpu.dot_dimension_numbers<[1], [0], [0], [1], [0, 0, 1, 1], [], []>} : vector<8x8xf32>, vector<8x8xf32>, vector<8x8xf32> -> vector<8x8xf32>
    %137 = vector.extract_strided_slice %88 {offsets = [0, 24], sizes = [8, 8], strides = [1, 1]} : vector<8x96xf32> to vector<8x8xf32>
    %cst_55 = arith.constant 0.353553385 : f32
    %138 = vector.broadcast %cst_55 : f32 to vector<8x8xf32>
    %139 = arith.mulf %137, %138 : vector<8x8xf32>
    %140 = vector.extract_strided_slice %88 {offsets = [0, 56], sizes = [8, 8], strides = [1, 1]} : vector<8x96xf32> to vector<8x8xf32>
    %141 = vector.extract_strided_slice %88 {offsets = [0, 88], sizes = [8, 8], strides = [1, 1]} : vector<8x96xf32> to vector<8x8xf32>
    %cst_56 = arith.constant dense<0.000000e+00> : vector<8x8xf32>
    %142 = tpu.matmul %139, %140, %cst_56 {dimension_numbers = #tpu.dot_dimension_numbers<[1], [1], [0], [0], [0, 0, 1, 0], [], []>} : vector<8x8xf32>, vector<8x8xf32>, vector<8x8xf32> -> vector<8x8xf32>
    %cst_57 = arith.constant dense<0xFF800000> : vector<8xf32>
    %143 = vector.multi_reduction <maximumf>, %142, %cst_57 [1] : vector<8x8xf32> to vector<8xf32>
    %144 = vector.shape_cast %143 : vector<8xf32> to vector<8x1xf32>
    %145 = vector.broadcast %144 : vector<8x1xf32> to vector<8x8xf32>
    %146 = arith.subf %142, %145 : vector<8x8xf32>
    %147 = math.exp %146 : vector<8x8xf32>
    %cst_58 = arith.constant dense<0.000000e+00> : vector<8xf32>
    %148 = vector.multi_reduction <add>, %147, %cst_58 [1] : vector<8x8xf32> to vector<8xf32>
    %149 = vector.shape_cast %148 : vector<8xf32> to vector<8x1xf32>
    %150 = vector.broadcast %149 : vector<8x1xf32> to vector<8x8xf32>
    %151 = arith.divf %147, %150 : vector<8x8xf32>
    %cst_59 = arith.constant dense<0.000000e+00> : vector<8x8xf32>
    %152 = tpu.matmul %151, %141, %cst_59 {dimension_numbers = #tpu.dot_dimension_numbers<[1], [0], [0], [1], [0, 0, 1, 1], [], []>} : vector<8x8xf32>, vector<8x8xf32>, vector<8x8xf32> -> vector<8x8xf32>
    %153 = tpu.concatenate %104, %120, %136, %152 in 1 : vector<8x8xf32>, vector<8x8xf32>, vector<8x8xf32>, vector<8x8xf32> -> vector<8x32xf32>
    %cst_60 = arith.constant dense<0.000000e+00> : vector<8x32xf32>
    %154 = tpu.matmul %153, %2, %cst_60 {dimension_numbers = #tpu.dot_dimension_numbers<[1], [0], [0], [1], [0, 0, 1, 1], [], []>} : vector<8x32xf32>, vector<32x32xf32>, vector<8x32xf32> -> vector<8x32xf32>
    %155 = vector.broadcast %3 : vector<1x32xf32> to vector<8x32xf32>
    %156 = arith.addf %154, %155 : vector<8x32xf32>
    %157 = arith.addf %156, %85 : vector<8x32xf32>
    %cst_61 = arith.constant dense<0.000000e+00> : vector<8x32xf32>
    %158 = tpu.matmul %157, %4, %cst_61 {dimension_numbers = #tpu.dot_dimension_numbers<[1], [0], [0], [1], [0, 0, 1, 1], [], []>} : vector<8x32xf32>, vector<32x32xf32>, vector<8x32xf32> -> vector<8x32xf32>
    %159 = arith.addf %158, %157 : vector<8x32xf32>
    %c0_62 = arith.constant 0 : index
    %c1_63 = arith.constant 1 : index
    %c0_64 = arith.constant 0 : index
    %160 = vector.load %arg7[%c0_62, %c1_63, %c0_64] : memref<8x2x32xf32, #tpu.memory_space<vmem>>, vector<8x1x32xf32>
    %161 = vector.shape_cast %160 : vector<8x1x32xf32> to vector<8x32xf32>
    %162 = vector.shape_cast %159 : vector<8x32xf32> to vector<8x1x32xf32>
    tpu.vector_store %arg7[%c0_62, %c1_63, %c0_64], %162 {strides = array<i32>} : memref<8x2x32xf32, #tpu.memory_space<vmem>>, vector<8x1x32xf32>,
    return
  }
  func.func @transform_0(%arg0: i32) -> (i32, i32, i32) {
    %c0_i32 = arith.constant 0 : i32
    %c0_i32_0 = arith.constant 0 : i32
    %c0_i32_1 = arith.constant 0 : i32
    %c0_i32_2 = arith.constant 0 : i32
    return %c0_i32, %c0_i32_0, %c0_i32_1 : i32, i32, i32
  }
  func.func @transform_1(%arg0: i32) -> (i32, i32) {
    %c0_i32 = arith.constant 0 : i32
    %c0_i32_0 = arith.constant 0 : i32
    %c0_i32_1 = arith.constant 0 : i32
    return %c0_i32, %c0_i32_0 : i32, i32
  }
  func.func @transform_2(%arg0: i32) -> (i32, i32) {
    %c0_i32 = arith.constant 0 : i32
    %c0_i32_0 = arith.constant 0 : i32
    %c0_i32_1 = arith.constant 0 : i32
    return %c0_i32, %c0_i32_0 : i32, i32
  }
  func.func @transform_3(%arg0: i32) -> (i32, i32) {
    %c0_i32 = arith.constant 0 : i32
    %c0_i32_0 = arith.constant 0 : i32
    %c0_i32_1 = arith.constant 0 : i32
    return %c0_i32, %c0_i32_0 : i32, i32
  }
  func.func @transform_4(%arg0: i32) -> (i32, i32) {
    %c0_i32 = arith.constant 0 : i32
    %c0_i32_0 = arith.constant 0 : i32
    %c0_i32_1 = arith.constant 0 : i32
    return %c0_i32, %c0_i32_0 : i32, i32
  }
  func.func @transform_5(%arg0: i32) -> (i32, i32) {
    %c0_i32 = arith.constant 0 : i32
    %c0_i32_0 = arith.constant 0 : i32
    %c0_i32_1 = arith.constant 0 : i32
    return %c0_i32, %c0_i32_0 : i32, i32
  }
  func.func @transform_6(%arg0: i32) -> (i32, i32, i32) {
    %c0_i32 = arith.constant 0 : i32
    %c0_i32_0 = arith.constant 0 : i32
    %c0_i32_1 = arith.constant 0 : i32
    %c0_i32_2 = arith.constant 0 : i32
    return %c0_i32, %c0_i32_0, %c0_i32_1 : i32, i32, i32
  }
}

</mosaic_0001>

<llo_original>
// kernel: transformer_layer_forward.1
$region0: #{transformer_layer_forward.1}
  #allocation0 [shape = 'u32[]', space=smem, size = 0x4, offset = 0x4, fixed_abs, tag = 'smem constant byte address 0x4 - core index']
  #allocation1 [shape = 'u32[144,128]{1,0:T(1,128)}', space=vmem, size = 0x12000, scoped, tag = 'internal scratch']
  %s0 = inlined_call_operand.vmem [shape: f32[8,2,32], index: 0, kind: input, shape index: {}]
  %s1 = inlined_call_operand.vmem [shape: f32[32,96], index: 1, kind: input, shape index: {}]
  %s2 = inlined_call_operand.vmem [shape: f32[1,96], index: 2, kind: input, shape index: {}]
  %s3 = inlined_call_operand.vmem [shape: f32[32,32], index: 3, kind: input, shape index: {}]
  %s4 = inlined_call_operand.vmem [shape: f32[1,32], index: 4, kind: input, shape index: {}]
  %s5 = inlined_call_operand.vmem [shape: f32[32,32], index: 5, kind: input, shape index: {}]
  %s6 = inlined_call_operand.hbm [shape: f32[8,2,32], index: 6, kind: output, shape index: {}]
  %s7 = sld [smem:[#allocation0]]
  $region34: #{transformer_layer_forward.1} parent=0
    _
  %s9 = ssub.s32 1, %s7
  %s10 = scalar_select 0, %s9, %s7
  $region1: #{transformer_layer_forward.1} parent=0
    #allocation2 [shape = 'u8[8192]{0}', space=vmem, size = 0x2000, scoped, tag = 'output window, operand 0, single buffered']
    #allocation3 [shape = 's32[1]{0}', space=sflag, size = 0x4, scoped, tag = 'scoped memory for transformer_layer_forward.1']
    %11 = vsyncpa [#allocation3], 0
    // Predicated region
    $region2: #{transformer_layer_forward.1} parent=1 // pred_check
      _
    $region3: #{transformer_layer_forward.1} parent=1 // pred_check_branch
      %13 = sbr.rel (0) target = $region5
    $region4: #{transformer_layer_forward.1} parent=1 // pred_region
      _
    $region5: #{transformer_layer_forward.1} parent=1 // pred_fallthru
      _
    // Predicated region
    $region6: #{transformer_layer_forward.1} parent=1 // pred_check
      _
    $region7: #{transformer_layer_forward.1} parent=1 // pred_check_branch
      %15 = sbr.rel (0) target = $region9
    $region8: #{transformer_layer_forward.1} parent=1 // pred_region
      _
    $region9: #{transformer_layer_forward.1} parent=1 // pred_fallthru
      _
    // Predicated region
    $region10: #{transformer_layer_forward.1} parent=1 // pred_check
      _
    $region11: #{transformer_layer_forward.1} parent=1 // pred_check_branch
      %17 = sbr.rel (0) target = $region13
    $region12: #{transformer_layer_forward.1} parent=1 // pred_region
      _
    $region13: #{transformer_layer_forward.1} parent=1 // pred_fallthru
      _
    // Predicated region
    $region14: #{transformer_layer_forward.1} parent=1 // pred_check
      _
    $region15: #{transformer_layer_forward.1} parent=1 // pred_check_branch
      %19 = sbr.rel (0) target = $region17
    $region16: #{transformer_layer_forward.1} parent=1 // pred_region
      _
    $region17: #{transformer_layer_forward.1} parent=1 // pred_fallthru
      _
    // Predicated region
    $region18: #{transformer_layer_forward.1} parent=1 // pred_check
      _
    $region19: #{transformer_layer_forward.1} parent=1 // pred_check_branch
      %21 = sbr.rel (0) target = $region21
    $region20: #{transformer_layer_forward.1} parent=1 // pred_region
      _
    $region21: #{transformer_layer_forward.1} parent=1 // pred_fallthru
      _
    // Predicated region
    $region22: #{transformer_layer_forward.1} parent=1 // pred_check
      _
    $region23: #{transformer_layer_forward.1} parent=1 // pred_check_branch
      %23 = sbr.rel (0) target = $region25
    $region24: #{transformer_layer_forward.1} parent=1 // pred_region
      _
    $region25: #{transformer_layer_forward.1} parent=1 // pred_fallthru
      _
    %v24 = vld [vmem:[%s1] sm:$0xff]
    %v25 = vld [vmem:[%s1 + $0x8] sm:$0xff]
    %v26 = vld [vmem:[%s1 + $0x10] sm:$0xff]
    %v27 = vld [vmem:[%s1 + $0x18] sm:$0xff]
    %v28 = vld [vmem:[%s2] sm:$0x1]
    %v29 = vld [vmem:[%s3] sm:$0xff]
    %v30 = vld [vmem:[%s3 + $0x8] sm:$0xff]
    %v31 = vld [vmem:[%s3 + $0x10] sm:$0xff]
    %v32 = vld [vmem:[%s3 + $0x18] sm:$0xff]
    %v33 = vld [vmem:[%s4] sm:$0x1]
    %v34 = vld [vmem:[%s5] sm:$0xff]
    %v35 = vld [vmem:[%s5 + $0x8] sm:$0xff]
    %v36 = vld [vmem:[%s5 + $0x10] sm:$0xff]
    %v37 = vld [vmem:[%s5 + $0x18] sm:$0xff]
    %v38 = vld [vmem:[%s0] sm:$0x1]
    %v39 = vld [vmem:[%s0 + $0x2] sm:$0x1]
    %v40 = vld [vmem:[%s0 + $0x4] sm:$0x1]
    %v41 = vld [vmem:[%s0 + $0x6] sm:$0x1]
    %v42 = vld [vmem:[%s0 + $0x8] sm:$0x1]
    %v43 = vld [vmem:[%s0 + $0xa] sm:$0x1]
    %v44 = vld [vmem:[%s0 + $0xc] sm:$0x1]
    %v45 = vld [vmem:[%s0 + $0xe] sm:$0x1]
    %v47 = vlaneseq
    %v48 = vshrl.u32 %v47, 7
    %v49 = vsub.s32 0, %v48
    %v50 = vrot.slane %v28, %v49
    %v60 = vrot.slane %v39, 7
    %vm61 = vcmask 1041409
    %v62 = vsel %vm61, %v60, %v38
    %v63 = vrot.slane %v40, 6
    %vm64 = vcmask 1042434
    %v65 = vsel %vm64, %v63, %v62
    %v66 = vrot.slane %v41, 5
    %vm67 = vcmask 1043459
    %v68 = vsel %vm67, %v66, %v65
    %v69 = vrot.slane %v42, 4
    %vm70 = vcmask 1044484
    %v71 = vsel %vm70, %v69, %v68
    %v72 = vrot.slane %v43, 3
    %vm73 = vcmask 1045509
    %v74 = vsel %vm73, %v72, %v71
    %v75 = vrot.slane %v44, 2
    %vm76 = vcmask 1046534
    %v77 = vsel %vm76, %v75, %v74
    %v78 = vrot.slane %v45, 1
    %vm79 = vcmask 1047559
    %v80 = vsel %vm79, %v78, %v77
    %vm81 = vcmask 261120
    %v82 = vsel %vm81, %v80, 0
    %84 = vmatprep.subr.mxu0 0.0
    %85 = vmatpush1.msra.mxu0 %v24
    %86 = vmatprep.subr.mxu0 0.0
    %87 = vmatpush1.msra.mxu0 %v25
    %88 = vmatprep.subr.mxu0 0.0
    %89 = vmatpush1.msra.mxu0 %v26
    %90 = vmatprep.subr.mxu0 0.0
    %91 = vmatpush1.msra.mxu0 %v27
    %92 = vmatprep.subr.mxu0 0.0
    %93 = vmatpush1.msra.mxu0 0.0
    %94 = vmatprep.subr.mxu0 0.0
    %95 = vmatpush1.msra.mxu0 0.0
    %96 = vmatprep.subr.mxu0 0.0
    %97 = vmatpush1.msra.mxu0 0.0
    %98 = vmatprep.subr.mxu0 0.0
    %99 = vmatpush1.msra.mxu0 0.0
    %100 = vmatprep.subr.mxu0 0.0
    %101 = vmatpush1.msra.mxu0 0.0
    %102 = vmatprep.subr.mxu0 0.0
    %103 = vmatpush1.msra.mxu0 0.0
    %104 = vmatprep.subr.mxu0 0.0
    %105 = vmatpush1.msra.mxu0 0.0
    %106 = vmatprep.subr.mxu0 0.0
    %107 = vmatpush1.msra.mxu0 0.0
    %108 = vmatprep.subr.mxu0 0.0
    %109 = vmatpush1.msra.mxu0 0.0
    %110 = vmatprep.subr.mxu0 0.0
    %111 = vmatpush1.msra.mxu0 0.0
    %112 = vmatprep.subr.mxu0 0.0
    %113 = vmatpush1.msra.mxu0 0.0
    %114 = vmatprep.subr.mxu0 0.0
    %115 = vmatpush1.msra.mxu0 0.0
    %116 = vmatprep.subr.mxu0 0.0
    %117 = vmatpush1.msra.mxu0 0.0
    %118 = vmatprep.subr.mxu0 0.0
    %119 = vmatpush1.msra.mxu0 0.0
    %120 = vmatprep.subr.mxu0 0.0
    %121 = vmatpush1.msra.mxu0 0.0
    %122 = vmatprep.subr.mxu0 0.0
    %123 = vmatpush1.msra.mxu0 0.0
    %124 = vmatprep.subr.mxu0 0.0
    %125 = vmatpush1.msra.mxu0 0.0
    %126 = vmatprep.subr.mxu0 0.0
    %127 = vmatpush1.msra.mxu0 0.0
    %128 = vmatprep.subr.mxu0 0.0
    %129 = vmatpush1.msra.mxu0 0.0
    %130 = vmatprep.subr.mxu0 0.0
    %131 = vmatpush1.msra.mxu0 0.0
    %132 = vmatprep.subr.mxu0 0.0
    %133 = vmatpush1.msra.mxu0 0.0
    %134 = vmatprep.subr.mxu0 0.0
    %135 = vmatpush1.msra.mxu0 0.0
    %136 = vmatprep.subr.mxu0 0.0
    %137 = vmatpush1.msra.mxu0 0.0
    %138 = vmatprep.subr.mxu0 0.0
    %139 = vmatpush1.msra.mxu0 0.0
    %140 = vmatprep.subr.mxu0 0.0
    %141 = vmatpush1.msra.mxu0 0.0
    %142 = vmatprep.subr.mxu0 0.0
    %143 = vmatpush1.msra.mxu0 0.0
    %144 = vmatprep.subr.mxu0 0.0
    %145 = vmatpush1.msra.mxu0 0.0
    %146 = vmatprep.subr.mxu0 0.0
    %147 = vmatpush1.msra.mxu0 0.0
    %148 = vmatprep.mubr.f32.mxu0 0.0
    %149 = vmatmul.mubr.f32.gmra.mrb[0].mxu0 %v82
    %v150 = vpop.f32.mrb[0].mxu0
    %v151 = vadd.f32 %v50, %v150
    %v152 = vpop.f32.mrb[0].mxu0
    %153 = vdwg.mxu0
    %v154 = vmul.f32 %v151, 0.35355338
    %156 = vrot.lane.b32.xlu0 %v151, 96
    %v157 = vpop.permute.xlu0 %156
    %vm158 = vcmask 64512
    %v160 = vsel %vm158, %v154, 0
    %v162 = vsel %vm158, %v157, 0
    %164 = vmatprep.subr.mxu0 0.0
    %165 = vmatpush1.xpose.msra.mxu0 %v162
    %166 = vmatprep.subr.mxu0 0.0
    %167 = vmatpush1.xpose.msra.mxu0 0.0
    %168 = vmatprep.subr.mxu0 0.0
    %169 = vmatpush1.xpose.msra.mxu0 0.0
    %170 = vmatprep.subr.mxu0 0.0
    %171 = vmatpush1.xpose.msra.mxu0 0.0
    %172 = vmatprep.subr.mxu0 0.0
    %173 = vmatpush1.xpose.msra.mxu0 0.0
    %174 = vmatprep.subr.mxu0 0.0
    %175 = vmatpush1.xpose.msra.mxu0 0.0
    %176 = vmatprep.subr.mxu0 0.0
    %177 = vmatpush1.xpose.msra.mxu0 0.0
    %178 = vmatprep.subr.mxu0 0.0
    %179 = vmatpush1.xpose.msra.mxu0 0.0
    %180 = vmatprep.subr.mxu0 0.0
    %181 = vmatpush1.xpose.msra.mxu0 0.0
    %182 = vmatprep.subr.mxu0 0.0
    %183 = vmatpush1.xpose.msra.mxu0 0.0
    %184 = vmatprep.subr.mxu0 0.0
    %185 = vmatpush1.xpose.msra.mxu0 0.0
    %186 = vmatprep.subr.mxu0 0.0
    %187 = vmatpush1.xpose.msra.mxu0 0.0
    %188 = vmatprep.subr.mxu0 0.0
    %189 = vmatpush1.xpose.msra.mxu0 0.0
    %190 = vmatprep.subr.mxu0 0.0
    %191 = vmatpush1.xpose.msra.mxu0 0.0
    %192 = vmatprep.subr.mxu0 0.0
    %193 = vmatpush1.xpose.msra.mxu0 0.0
    %194 = vmatprep.subr.mxu0 0.0
    %195 = vmatpush1.xpose.msra.mxu0 0.0
    %196 = vmatprep.subr.mxu0 0.0
    %197 = vmatpush1.xpose.msra.mxu0 0.0
    %198 = vmatprep.subr.mxu0 0.0
    %199 = vmatpush1.xpose.msra.mxu0 0.0
    %200 = vmatprep.subr.mxu0 0.0
    %201 = vmatpush1.xpose.msra.mxu0 0.0
    %202 = vmatprep.subr.mxu0 0.0
    %203 = vmatpush1.xpose.msra.mxu0 0.0
    %204 = vmatprep.subr.mxu0 0.0
    %205 = vmatpush1.xpose.msra.mxu0 0.0
    %206 = vmatprep.subr.mxu0 0.0
    %207 = vmatpush1.xpose.msra.mxu0 0.0
    %208 = vmatprep.subr.mxu0 0.0
    %209 = vmatpush1.xpose.msra.mxu0 0.0
    %210 = vmatprep.subr.mxu0 0.0
    %211 = vmatpush1.xpose.msra.mxu0 0.0
    %212 = vmatprep.subr.mxu0 0.0
    %213 = vmatpush1.xpose.msra.mxu0 0.0
    %214 = vmatprep.subr.mxu0 0.0
    %215 = vmatpush1.xpose.msra.mxu0 0.0
    %216 = vmatprep.subr.mxu0 0.0
    %217 = vmatpush1.xpose.msra.mxu0 0.0
    %218 = vmatprep.subr.mxu0 0.0
    %219 = vmatpush1.xpose.msra.mxu0 0.0
    %220 = vmatprep.subr.mxu0 0.0
    %221 = vmatpush1.xpose.msra.mxu0 0.0
    %222 = vmatprep.subr.mxu0 0.0
    %223 = vmatpush1.xpose.msra.mxu0 0.0
    %224 = vmatprep.subr.mxu0 0.0
    %225 = vmatpush1.xpose.msra.mxu0 0.0
    %226 = vmatprep.subr.mxu0 0.0
    %227 = vmatpush1.xpose.msra.mxu0 0.0
    %228 = vmatprep.mubr.f32.mxu0 0.0
    %229 = vmatmul.mubr.f32.gmra.mrb[0].mxu0 %v160
    %v230 = vpop.f32.mrb[0].mxu0
    %v231 = vadd.f32 0.0, %v230
    %v232 = vpop.f32.mrb[0].mxu0
    %233 = vdwg.mxu0
    %v234 = vsel %vm158, %v231, -inf
    %235 = vmax.xlane.f32.xlu0 %v234
    %v236 = vpop.xlane.xlu0 %235
    %v237 = vsub.f32 %v231, %v236
    %v238 = vmul.f32 %v237, 1.442695
    %v239 = vpow.pop %v238
    %v240 = vsel %vm158, %v239, 0.0
    %241 = vadd.xlane.f32.xlu0 %v240
    %v242 = vpop.xlane.xlu0 %241
    %v243 = vrcp.pop %v242
    %v244 = vmul.f32 %v239, %v243
    %245 = vrot.lane.b32.xlu0 %v151, 64
    %v246 = vpop.permute.xlu0 %245
    %v249 = vsel %vm158, %v244, 0
    %251 = vmatprep.subr.mxu0 0.0
    %252 = vmatpush1.msra.mxu0 %v246
    %253 = vmatprep.subr.mxu0 0.0
    %254 = vmatpush1.msra.mxu0 0.0
    %255 = vmatprep.subr.mxu0 0.0
    %256 = vmatpush1.msra.mxu0 0.0
    %257 = vmatprep.subr.mxu0 0.0
    %258 = vmatpush1.msra.mxu0 0.0
    %259 = vmatprep.subr.mxu0 0.0
    %260 = vmatpush1.msra.mxu0 0.0
    %261 = vmatprep.subr.mxu0 0.0
    %262 = vmatpush1.msra.mxu0 0.0
    %263 = vmatprep.subr.mxu0 0.0
    %264 = vmatpush1.msra.mxu0 0.0
    %265 = vmatprep.subr.mxu0 0.0
    %266 = vmatpush1.msra.mxu0 0.0
    %267 = vmatprep.subr.mxu0 0.0
    %268 = vmatpush1.msra.mxu0 0.0
    %269 = vmatprep.subr.mxu0 0.0
    %270 = vmatpush1.msra.mxu0 0.0
    %271 = vmatprep.subr.mxu0 0.0
    %272 = vmatpush1.msra.mxu0 0.0
    %273 = vmatprep.subr.mxu0 0.0
    %274 = vmatpush1.msra.mxu0 0.0
    %275 = vmatprep.subr.mxu0 0.0
    %276 = vmatpush1.msra.mxu0 0.0
    %277 = vmatprep.subr.mxu0 0.0
    %278 = vmatpush1.msra.mxu0 0.0
    %279 = vmatprep.subr.mxu0 0.0
    %280 = vmatpush1.msra.mxu0 0.0
    %281 = vmatprep.subr.mxu0 0.0
    %282 = vmatpush1.msra.mxu0 0.0
    %283 = vmatprep.subr.mxu0 0.0
    %284 = vmatpush1.msra.mxu0 0.0
    %285 = vmatprep.subr.mxu0 0.0
    %286 = vmatpush1.msra.mxu0 0.0
    %287 = vmatprep.subr.mxu0 0.0
    %288 = vmatpush1.msra.mxu0 0.0
    %289 = vmatprep.subr.mxu0 0.0
    %290 = vmatpush1.msra.mxu0 0.0
    %291 = vmatprep.subr.mxu0 0.0
    %292 = vmatpush1.msra.mxu0 0.0
    %293 = vmatprep.subr.mxu0 0.0
    %294 = vmatpush1.msra.mxu0 0.0
    %295 = vmatprep.subr.mxu0 0.0
    %296 = vmatpush1.msra.mxu0 0.0
    %297 = vmatprep.subr.mxu0 0.0
    %298 = vmatpush1.msra.mxu0 0.0
    %299 = vmatprep.subr.mxu0 0.0
    %300 = vmatpush1.msra.mxu0 0.0
    %301 = vmatprep.subr.mxu0 0.0
    %302 = vmatpush1.msra.mxu0 0.0
    %303 = vmatprep.subr.mxu0 0.0
    %304 = vmatpush1.msra.mxu0 0.0
    %305 = vmatprep.subr.mxu0 0.0
    %306 = vmatpush1.msra.mxu0 0.0
    %307 = vmatprep.subr.mxu0 0.0
    %308 = vmatpush1.msra.mxu0 0.0
    %309 = vmatprep.subr.mxu0 0.0
    %310 = vmatpush1.msra.mxu0 0.0
    %311 = vmatprep.subr.mxu0 0.0
    %312 = vmatpush1.msra.mxu0 0.0
    %313 = vmatprep.subr.mxu0 0.0
    %314 = vmatpush1.msra.mxu0 0.0
    %315 = vmatprep.mubr.f32.mxu0 0.0
    %316 = vmatmul.mubr.f32.gmra.mrb[0].mxu0 %v249
    %v317 = vpop.f32.mrb[0].mxu0
    %v318 = vadd.f32 0.0, %v317
    %v319 = vpop.f32.mrb[0].mxu0
    %320 = vdwg.mxu0
    %321 = vrot.lane.b32.xlu0 %v154, 120
    %v322 = vpop.permute.xlu0 %321
    %323 = vrot.lane.b32.xlu0 %v151, 88
    %v324 = vpop.permute.xlu0 %323
    %v325 = vsel %vm158, %v322, 0
    %v327 = vsel %vm158, %v324, 0
    %329 = vmatprep.subr.mxu0 0.0
    %330 = vmatpush1.xpose.msra.mxu0 %v327
    %331 = vmatprep.subr.mxu0 0.0
    %332 = vmatpush1.xpose.msra.mxu0 0.0
    %333 = vmatprep.subr.mxu0 0.0
    %334 = vmatpush1.xpose.msra.mxu0 0.0
    %335 = vmatprep.subr.mxu0 0.0
    %336 = vmatpush1.xpose.msra.mxu0 0.0
    %337 = vmatprep.subr.mxu0 0.0
    %338 = vmatpush1.xpose.msra.mxu0 0.0
    %339 = vmatprep.subr.mxu0 0.0
    %340 = vmatpush1.xpose.msra.mxu0 0.0
    %341 = vmatprep.subr.mxu0 0.0
    %342 = vmatpush1.xpose.msra.mxu0 0.0
    %343 = vmatprep.subr.mxu0 0.0
    %344 = vmatpush1.xpose.msra.mxu0 0.0
    %345 = vmatprep.subr.mxu0 0.0
    %346 = vmatpush1.xpose.msra.mxu0 0.0
    %347 = vmatprep.subr.mxu0 0.0
    %348 = vmatpush1.xpose.msra.mxu0 0.0
    %349 = vmatprep.subr.mxu0 0.0
    %350 = vmatpush1.xpose.msra.mxu0 0.0
    %351 = vmatprep.subr.mxu0 0.0
    %352 = vmatpush1.xpose.msra.mxu0 0.0
    %353 = vmatprep.subr.mxu0 0.0
    %354 = vmatpush1.xpose.msra.mxu0 0.0
    %355 = vmatprep.subr.mxu0 0.0
    %356 = vmatpush1.xpose.msra.mxu0 0.0
    %357 = vmatprep.subr.mxu0 0.0
    %358 = vmatpush1.xpose.msra.mxu0 0.0
    %359 = vmatprep.subr.mxu0 0.0
    %360 = vmatpush1.xpose.msra.mxu0 0.0
    %361 = vmatprep.subr.mxu0 0.0
    %362 = vmatpush1.xpose.msra.mxu0 0.0
    %363 = vmatprep.subr.mxu0 0.0
    %364 = vmatpush1.xpose.msra.mxu0 0.0
    %365 = vmatprep.subr.mxu0 0.0
    %366 = vmatpush1.xpose.msra.mxu0 0.0
    %367 = vmatprep.subr.mxu0 0.0
    %368 = vmatpush1.xpose.msra.mxu0 0.0
    %369 = vmatprep.subr.mxu0 0.0
    %370 = vmatpush1.xpose.msra.mxu0 0.0
    %371 = vmatprep.subr.mxu0 0.0
    %372 = vmatpush1.xpose.msra.mxu0 0.0
    %373 = vmatprep.subr.mxu0 0.0
    %374 = vmatpush1.xpose.msra.mxu0 0.0
    %375 = vmatprep.subr.mxu0 0.0
    %376 = vmatpush1.xpose.msra.mxu0 0.0
    %377 = vmatprep.subr.mxu0 0.0
    %378 = vmatpush1.xpose.msra.mxu0 0.0
    %379 = vmatprep.subr.mxu0 0.0
    %380 = vmatpush1.xpose.msra.mxu0 0.0
    %381 = vmatprep.subr.mxu0 0.0
    %382 = vmatpush1.xpose.msra.mxu0 0.0
    %383 = vmatprep.subr.mxu0 0.0
    %384 = vmatpush1.xpose.msra.mxu0 0.0
    %385 = vmatprep.subr.mxu0 0.0
    %386 = vmatpush1.xpose.msra.mxu0 0.0
    %387 = vmatprep.subr.mxu0 0.0
    %388 = vmatpush1.xpose.msra.mxu0 0.0
    %389 = vmatprep.subr.mxu0 0.0
    %390 = vmatpush1.xpose.msra.mxu0 0.0
    %391 = vmatprep.subr.mxu0 0.0
    %392 = vmatpush1.xpose.msra.mxu0 0.0
    %393 = vmatprep.mubr.f32.mxu0 0.0
    %394 = vmatmul.mubr.f32.gmra.mrb[0].mxu0 %v325
    %v395 = vpop.f32.mrb[0].mxu0
    %v396 = vadd.f32 0.0, %v395
    %v397 = vpop.f32.mrb[0].mxu0
    %398 = vdwg.mxu0
    %v399 = vsel %vm158, %v396, -inf
    %400 = vmax.xlane.f32.xlu0 %v399
    %v401 = vpop.xlane.xlu0 %400
    %v402 = vsub.f32 %v396, %v401
    %v403 = vmul.f32 %v402, 1.442695
    %v404 = vpow.pop %v403
    %v405 = vsel %vm158, %v404, 0.0
    %406 = vadd.xlane.f32.xlu0 %v405
    %v407 = vpop.xlane.xlu0 %406
    %v408 = vrcp.pop %v407
    %v409 = vmul.f32 %v404, %v408
    %410 = vrot.lane.b32.xlu0 %v151, 56
    %v411 = vpop.permute.xlu0 %410
    %v414 = vsel %vm158, %v409, 0
    %416 = vmatprep.subr.mxu0 0.0
    %417 = vmatpush1.msra.mxu0 %v411
    %418 = vmatprep.subr.mxu0 0.0
    %419 = vmatpush1.msra.mxu0 0.0
    %420 = vmatprep.subr.mxu0 0.0
    %421 = vmatpush1.msra.mxu0 0.0
    %422 = vmatprep.subr.mxu0 0.0
    %423 = vmatpush1.msra.mxu0 0.0
    %424 = vmatprep.subr.mxu0 0.0
    %425 = vmatpush1.msra.mxu0 0.0
    %426 = vmatprep.subr.mxu0 0.0
    %427 = vmatpush1.msra.mxu0 0.0
    %428 = vmatprep.subr.mxu0 0.0
    %429 = vmatpush1.msra.mxu0 0.0
    %430 = vmatprep.subr.mxu0 0.0
    %431 = vmatpush1.msra.mxu0 0.0
    %432 = vmatprep.subr.mxu0 0.0
    %433 = vmatpush1.msra.mxu0 0.0
    %434 = vmatprep.subr.mxu0 0.0
    %435 = vmatpush1.msra.mxu0 0.0
    %436 = vmatprep.subr.mxu0 0.0
    %437 = vmatpush1.msra.mxu0 0.0
    %438 = vmatprep.subr.mxu0 0.0
    %439 = vmatpush1.msra.mxu0 0.0
    %440 = vmatprep.subr.mxu0 0.0
    %441 = vmatpush1.msra.mxu0 0.0
    %442 = vmatprep.subr.mxu0 0.0
    %443 = vmatpush1.msra.mxu0 0.0
    %444 = vmatprep.subr.mxu0 0.0
    %445 = vmatpush1.msra.mxu0 0.0
    %446 = vmatprep.subr.mxu0 0.0
    %447 = vmatpush1.msra.mxu0 0.0
    %448 = vmatprep.subr.mxu0 0.0
    %449 = vmatpush1.msra.mxu0 0.0
    %450 = vmatprep.subr.mxu0 0.0
    %451 = vmatpush1.msra.mxu0 0.0
    %452 = vmatprep.subr.mxu0 0.0
    %453 = vmatpush1.msra.mxu0 0.0
    %454 = vmatprep.subr.mxu0 0.0
    %455 = vmatpush1.msra.mxu0 0.0
    %456 = vmatprep.subr.mxu0 0.0
    %457 = vmatpush1.msra.mxu0 0.0
    %458 = vmatprep.subr.mxu0 0.0
    %459 = vmatpush1.msra.mxu0 0.0
    %460 = vmatprep.subr.mxu0 0.0
    %461 = vmatpush1.msra.mxu0 0.0
    %462 = vmatprep.subr.mxu0 0.0
    %463 = vmatpush1.msra.mxu0 0.0
    %464 = vmatprep.subr.mxu0 0.0
    %465 = vmatpush1.msra.mxu0 0.0
    %466 = vmatprep.subr.mxu0 0.0
    %467 = vmatpush1.msra.mxu0 0.0
    %468 = vmatprep.subr.mxu0 0.0
    %469 = vmatpush1.msra.mxu0 0.0
    %470 = vmatprep.subr.mxu0 0.0
    %471 = vmatpush1.msra.mxu0 0.0
    %472 = vmatprep.subr.mxu0 0.0
    %473 = vmatpush1.msra.mxu0 0.0
    %474 = vmatprep.subr.mxu0 0.0
    %475 = vmatpush1.msra.mxu0 0.0
    %476 = vmatprep.subr.mxu0 0.0
    %477 = vmatpush1.msra.mxu0 0.0
    %478 = vmatprep.subr.mxu0 0.0
    %479 = vmatpush1.msra.mxu0 0.0
    %480 = vmatprep.mubr.f32.mxu0 0.0
    %481 = vmatmul.mubr.f32.gmra.mrb[0].mxu0 %v414
    %v482 = vpop.f32.mrb[0].mxu0
    %v483 = vadd.f32 0.0, %v482
    %v484 = vpop.f32.mrb[0].mxu0
    %485 = vdwg.mxu0
    %486 = vrot.lane.b32.xlu0 %v154, 112
    %v487 = vpop.permute.xlu0 %486
    %488 = vrot.lane.b32.xlu0 %v151, 80
    %v489 = vpop.permute.xlu0 %488
    %v490 = vsel %vm158, %v487, 0
    %v492 = vsel %vm158, %v489, 0
    %494 = vmatprep.subr.mxu0 0.0
    %495 = vmatpush1.xpose.msra.mxu0 %v492
    %496 = vmatprep.subr.mxu0 0.0
    %497 = vmatpush1.xpose.msra.mxu0 0.0
    %498 = vmatprep.subr.mxu0 0.0
    %499 = vmatpush1.xpose.msra.mxu0 0.0
    %500 = vmatprep.subr.mxu0 0.0
    %501 = vmatpush1.xpose.msra.mxu0 0.0
    %502 = vmatprep.subr.mxu0 0.0
    %503 = vmatpush1.xpose.msra.mxu0 0.0
    %504 = vmatprep.subr.mxu0 0.0
    %505 = vmatpush1.xpose.msra.mxu0 0.0
    %506 = vmatprep.subr.mxu0 0.0
    %507 = vmatpush1.xpose.msra.mxu0 0.0
    %508 = vmatprep.subr.mxu0 0.0
    %509 = vmatpush1.xpose.msra.mxu0 0.0
    %510 = vmatprep.subr.mxu0 0.0
    %511 = vmatpush1.xpose.msra.mxu0 0.0
    %512 = vmatprep.subr.mxu0 0.0
    %513 = vmatpush1.xpose.msra.mxu0 0.0
    %514 = vmatprep.subr.mxu0 0.0
    %515 = vmatpush1.xpose.msra.mxu0 0.0
    %516 = vmatprep.subr.mxu0 0.0
    %517 = vmatpush1.xpose.msra.mxu0 0.0
    %518 = vmatprep.subr.mxu0 0.0
    %519 = vmatpush1.xpose.msra.mxu0 0.0
    %520 = vmatprep.subr.mxu0 0.0
    %521 = vmatpush1.xpose.msra.mxu0 0.0
    %522 = vmatprep.subr.mxu0 0.0
    %523 = vmatpush1.xpose.msra.mxu0 0.0
    %524 = vmatprep.subr.mxu0 0.0
    %525 = vmatpush1.xpose.msra.mxu0 0.0
    %526 = vmatprep.subr.mxu0 0.0
    %527 = vmatpush1.xpose.msra.mxu0 0.0
    %528 = vmatprep.subr.mxu0 0.0
    %529 = vmatpush1.xpose.msra.mxu0 0.0
    %530 = vmatprep.subr.mxu0 0.0
    %531 = vmatpush1.xpose.msra.mxu0 0.0
    %532 = vmatprep.subr.mxu0 0.0
    %533 = vmatpush1.xpose.msra.mxu0 0.0
    %534 = vmatprep.subr.mxu0 0.0
    %535 = vmatpush1.xpose.msra.mxu0 0.0
    %536 = vmatprep.subr.mxu0 0.0
    %537 = vmatpush1.xpose.msra.mxu0 0.0
    %538 = vmatprep.subr.mxu0 0.0
    %539 = vmatpush1.xpose.msra.mxu0 0.0
    %540 = vmatprep.subr.mxu0 0.0
    %541 = vmatpush1.xpose.msra.mxu0 0.0
    %542 = vmatprep.subr.mxu0 0.0
    %543 = vmatpush1.xpose.msra.mxu0 0.0
    %544 = vmatprep.subr.mxu0 0.0
    %545 = vmatpush1.xpose.msra.mxu0 0.0
    %546 = vmatprep.subr.mxu0 0.0
    %547 = vmatpush1.xpose.msra.mxu0 0.0
    %548 = vmatprep.subr.mxu0 0.0
    %549 = vmatpush1.xpose.msra.mxu0 0.0
    %550 = vmatprep.subr.mxu0 0.0
    %551 = vmatpush1.xpose.msra.mxu0 0.0
    %552 = vmatprep.subr.mxu0 0.0
    %553 = vmatpush1.xpose.msra.mxu0 0.0
    %554 = vmatprep.subr.mxu0 0.0
    %555 = vmatpush1.xpose.msra.mxu0 0.0
    %556 = vmatprep.subr.mxu0 0.0
    %557 = vmatpush1.xpose.msra.mxu0 0.0
    %558 = vmatprep.mubr.f32.mxu0 0.0
    %559 = vmatmul.mubr.f32.gmra.mrb[0].mxu0 %v490
    %v560 = vpop.f32.mrb[0].mxu0
    %v561 = vadd.f32 0.0, %v560
    %v562 = vpop.f32.mrb[0].mxu0
    %563 = vdwg.mxu0
    %v564 = vsel %vm158, %v561, -inf
    %565 = vmax.xlane.f32.xlu0 %v564
    %v566 = vpop.xlane.xlu0 %565
    %v567 = vsub.f32 %v561, %v566
    %v568 = vmul.f32 %v567, 1.442695
    %v569 = vpow.pop %v568
    %v570 = vsel %vm158, %v569, 0.0
    %571 = vadd.xlane.f32.xlu0 %v570
    %v572 = vpop.xlane.xlu0 %571
    %v573 = vrcp.pop %v572
    %v574 = vmul.f32 %v569, %v573
    %575 = vrot.lane.b32.xlu0 %v151, 48
    %v576 = vpop.permute.xlu0 %575
    %v579 = vsel %vm158, %v574, 0
    %581 = vmatprep.subr.mxu0 0.0
    %582 = vmatpush1.msra.mxu0 %v576
    %583 = vmatprep.subr.mxu0 0.0
    %584 = vmatpush1.msra.mxu0 0.0
    %585 = vmatprep.subr.mxu0 0.0
    %586 = vmatpush1.msra.mxu0 0.0
    %587 = vmatprep.subr.mxu0 0.0
    %588 = vmatpush1.msra.mxu0 0.0
    %589 = vmatprep.subr.mxu0 0.0
    %590 = vmatpush1.msra.mxu0 0.0
    %591 = vmatprep.subr.mxu0 0.0
    %592 = vmatpush1.msra.mxu0 0.0
    %593 = vmatprep.subr.mxu0 0.0
    %594 = vmatpush1.msra.mxu0 0.0
    %595 = vmatprep.subr.mxu0 0.0
    %596 = vmatpush1.msra.mxu0 0.0
    %597 = vmatprep.subr.mxu0 0.0
    %598 = vmatpush1.msra.mxu0 0.0
    %599 = vmatprep.subr.mxu0 0.0
    %600 = vmatpush1.msra.mxu0 0.0
    %601 = vmatprep.subr.mxu0 0.0
    %602 = vmatpush1.msra.mxu0 0.0
    %603 = vmatprep.subr.mxu0 0.0
    %604 = vmatpush1.msra.mxu0 0.0
    %605 = vmatprep.subr.mxu0 0.0
    %606 = vmatpush1.msra.mxu0 0.0
    %607 = vmatprep.subr.mxu0 0.0
    %608 = vmatpush1.msra.mxu0 0.0
    %609 = vmatprep.subr.mxu0 0.0
    %610 = vmatpush1.msra.mxu0 0.0
    %611 = vmatprep.subr.mxu0 0.0
    %612 = vmatpush1.msra.mxu0 0.0
    %613 = vmatprep.subr.mxu0 0.0
    %614 = vmatpush1.msra.mxu0 0.0
    %615 = vmatprep.subr.mxu0 0.0
    %616 = vmatpush1.msra.mxu0 0.0
    %617 = vmatprep.subr.mxu0 0.0
    %618 = vmatpush1.msra.mxu0 0.0
    %619 = vmatprep.subr.mxu0 0.0
    %620 = vmatpush1.msra.mxu0 0.0
    %621 = vmatprep.subr.mxu0 0.0
    %622 = vmatpush1.msra.mxu0 0.0
    %623 = vmatprep.subr.mxu0 0.0
    %624 = vmatpush1.msra.mxu0 0.0
    %625 = vmatprep.subr.mxu0 0.0
    %626 = vmatpush1.msra.mxu0 0.0
    %627 = vmatprep.subr.mxu0 0.0
    %628 = vmatpush1.msra.mxu0 0.0
    %629 = vmatprep.subr.mxu0 0.0
    %630 = vmatpush1.msra.mxu0 0.0
    %631 = vmatprep.subr.mxu0 0.0
    %632 = vmatpush1.msra.mxu0 0.0
    %633 = vmatprep.subr.mxu0 0.0
    %634 = vmatpush1.msra.mxu0 0.0
    %635 = vmatprep.subr.mxu0 0.0
    %636 = vmatpush1.msra.mxu0 0.0
    %637 = vmatprep.subr.mxu0 0.0
    %638 = vmatpush1.msra.mxu0 0.0
    %639 = vmatprep.subr.mxu0 0.0
    %640 = vmatpush1.msra.mxu0 0.0
    %641 = vmatprep.subr.mxu0 0.0
    %642 = vmatpush1.msra.mxu0 0.0
    %643 = vmatprep.subr.mxu0 0.0
    %644 = vmatpush1.msra.mxu0 0.0
    %645 = vmatprep.mubr.f32.mxu0 0.0
    %646 = vmatmul.mubr.f32.gmra.mrb[0].mxu0 %v579
    %v647 = vpop.f32.mrb[0].mxu0
    %v648 = vadd.f32 0.0, %v647
    %v649 = vpop.f32.mrb[0].mxu0
    %650 = vdwg.mxu0
    %651 = vrot.lane.b32.xlu0 %v154, 104
    %v652 = vpop.permute.xlu0 %651
    %653 = vrot.lane.b32.xlu0 %v151, 72
    %v654 = vpop.permute.xlu0 %653
    %v655 = vsel %vm158, %v652, 0
    %v657 = vsel %vm158, %v654, 0
    %659 = vmatprep.subr.mxu0 0.0
    %660 = vmatpush1.xpose.msra.mxu0 %v657
    %661 = vmatprep.subr.mxu0 0.0
    %662 = vmatpush1.xpose.msra.mxu0 0.0
    %663 = vmatprep.subr.mxu0 0.0
    %664 = vmatpush1.xpose.msra.mxu0 0.0
    %665 = vmatprep.subr.mxu0 0.0
    %666 = vmatpush1.xpose.msra.mxu0 0.0
    %667 = vmatprep.subr.mxu0 0.0
    %668 = vmatpush1.xpose.msra.mxu0 0.0
    %669 = vmatprep.subr.mxu0 0.0
    %670 = vmatpush1.xpose.msra.mxu0 0.0
    %671 = vmatprep.subr.mxu0 0.0
    %672 = vmatpush1.xpose.msra.mxu0 0.0
    %673 = vmatprep.subr.mxu0 0.0
    %674 = vmatpush1.xpose.msra.mxu0 0.0
    %675 = vmatprep.subr.mxu0 0.0
    %676 = vmatpush1.xpose.msra.mxu0 0.0
    %677 = vmatprep.subr.mxu0 0.0
    %678 = vmatpush1.xpose.msra.mxu0 0.0
    %679 = vmatprep.subr.mxu0 0.0
    %680 = vmatpush1.xpose.msra.mxu0 0.0
    %681 = vmatprep.subr.mxu0 0.0
    %682 = vmatpush1.xpose.msra.mxu0 0.0
    %683 = vmatprep.subr.mxu0 0.0
    %684 = vmatpush1.xpose.msra.mxu0 0.0
    %685 = vmatprep.subr.mxu0 0.0
    %686 = vmatpush1.xpose.msra.mxu0 0.0
    %687 = vmatprep.subr.mxu0 0.0
    %688 = vmatpush1.xpose.msra.mxu0 0.0
    %689 = vmatprep.subr.mxu0 0.0
    %690 = vmatpush1.xpose.msra.mxu0 0.0
    %691 = vmatprep.subr.mxu0 0.0
    %692 = vmatpush1.xpose.msra.mxu0 0.0
    %693 = vmatprep.subr.mxu0 0.0
    %694 = vmatpush1.xpose.msra.mxu0 0.0
    %695 = vmatprep.subr.mxu0 0.0
    %696 = vmatpush1.xpose.msra.mxu0 0.0
    %697 = vmatprep.subr.mxu0 0.0
    %698 = vmatpush1.xpose.msra.mxu0 0.0
    %699 = vmatprep.subr.mxu0 0.0
    %700 = vmatpush1.xpose.msra.mxu0 0.0
    %701 = vmatprep.subr.mxu0 0.0
    %702 = vmatpush1.xpose.msra.mxu0 0.0
    %703 = vmatprep.subr.mxu0 0.0
    %704 = vmatpush1.xpose.msra.mxu0 0.0
    %705 = vmatprep.subr.mxu0 0.0
    %706 = vmatpush1.xpose.msra.mxu0 0.0
    %707 = vmatprep.subr.mxu0 0.0
    %708 = vmatpush1.xpose.msra.mxu0 0.0
    %709 = vmatprep.subr.mxu0 0.0
    %710 = vmatpush1.xpose.msra.mxu0 0.0
    %711 = vmatprep.subr.mxu0 0.0
    %712 = vmatpush1.xpose.msra.mxu0 0.0
    %713 = vmatprep.subr.mxu0 0.0
    %714 = vmatpush1.xpose.msra.mxu0 0.0
    %715 = vmatprep.subr.mxu0 0.0
    %716 = vmatpush1.xpose.msra.mxu0 0.0
    %717 = vmatprep.subr.mxu0 0.0
    %718 = vmatpush1.xpose.msra.mxu0 0.0
    %719 = vmatprep.subr.mxu0 0.0
    %720 = vmatpush1.xpose.msra.mxu0 0.0
    %721 = vmatprep.subr.mxu0 0.0
    %722 = vmatpush1.xpose.msra.mxu0 0.0
    %723 = vmatprep.mubr.f32.mxu0 0.0
    %724 = vmatmul.mubr.f32.gmra.mrb[0].mxu0 %v655
    %v725 = vpop.f32.mrb[0].mxu0
    %v726 = vadd.f32 0.0, %v725
    %v727 = vpop.f32.mrb[0].mxu0
    %728 = vdwg.mxu0
    %v729 = vsel %vm158, %v726, -inf
    %730 = vmax.xlane.f32.xlu0 %v729
    %v731 = vpop.xlane.xlu0 %730
    %v732 = vsub.f32 %v726, %v731
    %v733 = vmul.f32 %v732, 1.442695
    %v734 = vpow.pop %v733
    %v735 = vsel %vm158, %v734, 0.0
    %736 = vadd.xlane.f32.xlu0 %v735
    %v737 = vpop.xlane.xlu0 %736
    %v738 = vrcp.pop %v737
    %v739 = vmul.f32 %v734, %v738
    %740 = vrot.lane.b32.xlu0 %v151, 40
    %v741 = vpop.permute.xlu0 %740
    %v744 = vsel %vm158, %v739, 0
    %746 = vmatprep.subr.mxu0 0.0
    %747 = vmatpush1.msra.mxu0 %v741
    %748 = vmatprep.subr.mxu0 0.0
    %749 = vmatpush1.msra.mxu0 0.0
    %750 = vmatprep.subr.mxu0 0.0
    %751 = vmatpush1.msra.mxu0 0.0
    %752 = vmatprep.subr.mxu0 0.0
    %753 = vmatpush1.msra.mxu0 0.0
    %754 = vmatprep.subr.mxu0 0.0
    %755 = vmatpush1.msra.mxu0 0.0
    %756 = vmatprep.subr.mxu0 0.0
    %757 = vmatpush1.msra.mxu0 0.0
    %758 = vmatprep.subr.mxu0 0.0
    %759 = vmatpush1.msra.mxu0 0.0
    %760 = vmatprep.subr.mxu0 0.0
    %761 = vmatpush1.msra.mxu0 0.0
    %762 = vmatprep.subr.mxu0 0.0
    %763 = vmatpush1.msra.mxu0 0.0
    %764 = vmatprep.subr.mxu0 0.0
    %765 = vmatpush1.msra.mxu0 0.0
    %766 = vmatprep.subr.mxu0 0.0
    %767 = vmatpush1.msra.mxu0 0.0
    %768 = vmatprep.subr.mxu0 0.0
    %769 = vmatpush1.msra.mxu0 0.0
    %770 = vmatprep.subr.mxu0 0.0
    %771 = vmatpush1.msra.mxu0 0.0
    %772 = vmatprep.subr.mxu0 0.0
    %773 = vmatpush1.msra.mxu0 0.0
    %774 = vmatprep.subr.mxu0 0.0
    %775 = vmatpush1.msra.mxu0 0.0
    %776 = vmatprep.subr.mxu0 0.0
    %777 = vmatpush1.msra.mxu0 0.0
    %778 = vmatprep.subr.mxu0 0.0
    %779 = vmatpush1.msra.mxu0 0.0
    %780 = vmatprep.subr.mxu0 0.0
    %781 = vmatpush1.msra.mxu0 0.0
    %782 = vmatprep.subr.mxu0 0.0
    %783 = vmatpush1.msra.mxu0 0.0
    %784 = vmatprep.subr.mxu0 0.0
    %785 = vmatpush1.msra.mxu0 0.0
    %786 = vmatprep.subr.mxu0 0.0
    %787 = vmatpush1.msra.mxu0 0.0
    %788 = vmatprep.subr.mxu0 0.0
    %789 = vmatpush1.msra.mxu0 0.0
    %790 = vmatprep.subr.mxu0 0.0
    %791 = vmatpush1.msra.mxu0 0.0
    %792 = vmatprep.subr.mxu0 0.0
    %793 = vmatpush1.msra.mxu0 0.0
    %794 = vmatprep.subr.mxu0 0.0
    %795 = vmatpush1.msra.mxu0 0.0
    %796 = vmatprep.subr.mxu0 0.0
    %797 = vmatpush1.msra.mxu0 0.0
    %798 = vmatprep.subr.mxu0 0.0
    %799 = vmatpush1.msra.mxu0 0.0
    %800 = vmatprep.subr.mxu0 0.0
    %801 = vmatpush1.msra.mxu0 0.0
    %802 = vmatprep.subr.mxu0 0.0
    %803 = vmatpush1.msra.mxu0 0.0
    %804 = vmatprep.subr.mxu0 0.0
    %805 = vmatpush1.msra.mxu0 0.0
    %806 = vmatprep.subr.mxu0 0.0
    %807 = vmatpush1.msra.mxu0 0.0
    %808 = vmatprep.subr.mxu0 0.0
    %809 = vmatpush1.msra.mxu0 0.0
    %810 = vmatprep.mubr.f32.mxu0 0.0
    %811 = vmatmul.mubr.f32.gmra.mrb[0].mxu0 %v744
    %v812 = vpop.f32.mrb[0].mxu0
    %v813 = vadd.f32 0.0, %v812
    %v814 = vpop.f32.mrb[0].mxu0
    %815 = vdwg.mxu0
    %817 = vrot.lane.b32.xlu0 %v483, 8
    %v818 = vpop.permute.xlu0 %817
    %821 = vrot.lane.b32.xlu0 %v648, 16
    %v822 = vpop.permute.xlu0 %821
    %825 = vrot.lane.b32.xlu0 %v813, 24
    %v826 = vpop.permute.xlu0 %825
    %v828 = vsel %vm158, %v318, %v818
    %vm829 = vcmask 130048
    %v830 = vsel %vm829, %v828, %v822
    %vm831 = vcmask 195584
    %v832 = vsel %vm831, %v830, %v826
    %v834 = vlaneseq
    %v835 = vshrl.u32 %v834, 7
    %v836 = vsub.s32 0, %v835
    %v837 = vrot.slane %v33, %v836
    %v840 = vsel %vm81, %v832, 0
    %842 = vmatprep.subr.mxu0 0.0
    %843 = vmatpush1.msra.mxu0 %v29
    %844 = vmatprep.subr.mxu0 0.0
    %845 = vmatpush1.msra.mxu0 %v30
    %846 = vmatprep.subr.mxu0 0.0
    %847 = vmatpush1.msra.mxu0 %v31
    %848 = vmatprep.subr.mxu0 0.0
    %849 = vmatpush1.msra.mxu0 %v32
    %850 = vmatprep.subr.mxu0 0.0
    %851 = vmatpush1.msra.mxu0 0.0
    %852 = vmatprep.subr.mxu0 0.0
    %853 = vmatpush1.msra.mxu0 0.0
    %854 = vmatprep.subr.mxu0 0.0
    %855 = vmatpush1.msra.mxu0 0.0
    %856 = vmatprep.subr.mxu0 0.0
    %857 = vmatpush1.msra.mxu0 0.0
    %858 = vmatprep.subr.mxu0 0.0
    %859 = vmatpush1.msra.mxu0 0.0
    %860 = vmatprep.subr.mxu0 0.0
    %861 = vmatpush1.msra.mxu0 0.0
    %862 = vmatprep.subr.mxu0 0.0
    %863 = vmatpush1.msra.mxu0 0.0
    %864 = vmatprep.subr.mxu0 0.0
    %865 = vmatpush1.msra.mxu0 0.0
    %866 = vmatprep.subr.mxu0 0.0
    %867 = vmatpush1.msra.mxu0 0.0
    %868 = vmatprep.subr.mxu0 0.0
    %869 = vmatpush1.msra.mxu0 0.0
    %870 = vmatprep.subr.mxu0 0.0
    %871 = vmatpush1.msra.mxu0 0.0
    %872 = vmatprep.subr.mxu0 0.0
    %873 = vmatpush1.msra.mxu0 0.0
    %874 = vmatprep.subr.mxu0 0.0
    %875 = vmatpush1.msra.mxu0 0.0
    %876 = vmatprep.subr.mxu0 0.0
    %877 = vmatpush1.msra.mxu0 0.0
    %878 = vmatprep.subr.mxu0 0.0
    %879 = vmatpush1.msra.mxu0 0.0
    %880 = vmatprep.subr.mxu0 0.0
    %881 = vmatpush1.msra.mxu0 0.0
    %882 = vmatprep.subr.mxu0 0.0
    %883 = vmatpush1.msra.mxu0 0.0
    %884 = vmatprep.subr.mxu0 0.0
    %885 = vmatpush1.msra.mxu0 0.0
    %886 = vmatprep.subr.mxu0 0.0
    %887 = vmatpush1.msra.mxu0 0.0
    %888 = vmatprep.subr.mxu0 0.0
    %889 = vmatpush1.msra.mxu0 0.0
    %890 = vmatprep.subr.mxu0 0.0
    %891 = vmatpush1.msra.mxu0 0.0
    %892 = vmatprep.subr.mxu0 0.0
    %893 = vmatpush1.msra.mxu0 0.0
    %894 = vmatprep.subr.mxu0 0.0
    %895 = vmatpush1.msra.mxu0 0.0
    %896 = vmatprep.subr.mxu0 0.0
    %897 = vmatpush1.msra.mxu0 0.0
    %898 = vmatprep.subr.mxu0 0.0
    %899 = vmatpush1.msra.mxu0 0.0
    %900 = vmatprep.subr.mxu0 0.0
    %901 = vmatpush1.msra.mxu0 0.0
    %902 = vmatprep.subr.mxu0 0.0
    %903 = vmatpush1.msra.mxu0 0.0
    %904 = vmatprep.subr.mxu0 0.0
    %905 = vmatpush1.msra.mxu0 0.0
    %906 = vmatprep.mubr.f32.mxu0 0.0
    %907 = vmatmul.mubr.f32.gmra.mrb[0].mxu0 %v840
    %v908 = vpop.f32.mrb[0].mxu0
    %v909 = vadd.f32 %v837, %v908
    %v910 = vpop.f32.mrb[0].mxu0
    %911 = vdwg.mxu0
    %v913 = vadd.f32 %v909, %v80
    %v915 = vsel %vm81, %v913, 0
    %917 = vmatprep.subr.mxu0 0.0
    %918 = vmatpush1.msra.mxu0 %v34
    %919 = vmatprep.subr.mxu0 0.0
    %920 = vmatpush1.msra.mxu0 %v35
    %921 = vmatprep.subr.mxu0 0.0
    %922 = vmatpush1.msra.mxu0 %v36
    %923 = vmatprep.subr.mxu0 0.0
    %924 = vmatpush1.msra.mxu0 %v37
    %925 = vmatprep.subr.mxu0 0.0
    %926 = vmatpush1.msra.mxu0 0.0
    %927 = vmatprep.subr.mxu0 0.0
    %928 = vmatpush1.msra.mxu0 0.0
    %929 = vmatprep.subr.mxu0 0.0
    %930 = vmatpush1.msra.mxu0 0.0
    %931 = vmatprep.subr.mxu0 0.0
    %932 = vmatpush1.msra.mxu0 0.0
    %933 = vmatprep.subr.mxu0 0.0
    %934 = vmatpush1.msra.mxu0 0.0
    %935 = vmatprep.subr.mxu0 0.0
    %936 = vmatpush1.msra.mxu0 0.0
    %937 = vmatprep.subr.mxu0 0.0
    %938 = vmatpush1.msra.mxu0 0.0
    %939 = vmatprep.subr.mxu0 0.0
    %940 = vmatpush1.msra.mxu0 0.0
    %941 = vmatprep.subr.mxu0 0.0
    %942 = vmatpush1.msra.mxu0 0.0
    %943 = vmatprep.subr.mxu0 0.0
    %944 = vmatpush1.msra.mxu0 0.0
    %945 = vmatprep.subr.mxu0 0.0
    %946 = vmatpush1.msra.mxu0 0.0
    %947 = vmatprep.subr.mxu0 0.0
    %948 = vmatpush1.msra.mxu0 0.0
    %949 = vmatprep.subr.mxu0 0.0
    %950 = vmatpush1.msra.mxu0 0.0
    %951 = vmatprep.subr.mxu0 0.0
    %952 = vmatpush1.msra.mxu0 0.0
    %953 = vmatprep.subr.mxu0 0.0
    %954 = vmatpush1.msra.mxu0 0.0
    %955 = vmatprep.subr.mxu0 0.0
    %956 = vmatpush1.msra.mxu0 0.0
    %957 = vmatprep.subr.mxu0 0.0
    %958 = vmatpush1.msra.mxu0 0.0
    %959 = vmatprep.subr.mxu0 0.0
    %960 = vmatpush1.msra.mxu0 0.0
    %961 = vmatprep.subr.mxu0 0.0
    %962 = vmatpush1.msra.mxu0 0.0
    %963 = vmatprep.subr.mxu0 0.0
    %964 = vmatpush1.msra.mxu0 0.0
    %965 = vmatprep.subr.mxu0 0.0
    %966 = vmatpush1.msra.mxu0 0.0
    %967 = vmatprep.subr.mxu0 0.0
    %968 = vmatpush1.msra.mxu0 0.0
    %969 = vmatprep.subr.mxu0 0.0
    %970 = vmatpush1.msra.mxu0 0.0
    %971 = vmatprep.subr.mxu0 0.0
    %972 = vmatpush1.msra.mxu0 0.0
    %973 = vmatprep.subr.mxu0 0.0
    %974 = vmatpush1.msra.mxu0 0.0
    %975 = vmatprep.subr.mxu0 0.0
    %976 = vmatpush1.msra.mxu0 0.0
    %977 = vmatprep.subr.mxu0 0.0
    %978 = vmatpush1.msra.mxu0 0.0
    %979 = vmatprep.subr.mxu0 0.0
    %980 = vmatpush1.msra.mxu0 0.0
    %981 = vmatprep.mubr.f32.mxu0 0.0
    %982 = vmatmul.mubr.f32.gmra.mrb[0].mxu0 %v915
    %v983 = vpop.f32.mrb[0].mxu0
    %v984 = vadd.f32 %v913, %v983
    %v985 = vpop.f32.mrb[0].mxu0
    %986 = vdwg.mxu0
    %v988 = vcombine.high %v984, %v984
    %v990 = vunpack.c.l.s4 1966171168
    %v991 = vunpack.c.0.s8 %v990
    %v992 = vlaneseq
    %v993 = vshrl.u32 %v992, 7
    %v994 = vsub.s32 %v991, %v993
    %v995 = vrot.slane %v984, %v994
    %v997 = vunpack.c.l.s4 1966171168
    %v998 = vunpack.c.0.s8 %v997
    %v999 = vlaneseq
    %v1000 = vshrl.u32 %v999, 7
    %v1001 = vsub.s32 %v998, %v1000
    %v1002 = vrot.slane %v988, %v1001
    %v1003 = vcombine.high %v995, %v995
    %v1004 = vcombine.high %v1002, %v1002
    %v1006 = vunpack.c.l.s4 1966171168
    %v1007 = vunpack.c.0.s8 %v1006
    %v1008 = vlaneseq
    %v1009 = vshrl.u32 %v1008, 7
    %v1010 = vsub.s32 %v1007, %v1009
    %v1011 = vrot.slane %v995, %v1010
    %v1013 = vunpack.c.l.s4 1966171168
    %v1014 = vunpack.c.0.s8 %v1013
    %v1015 = vlaneseq
    %v1016 = vshrl.u32 %v1015, 7
    %v1017 = vsub.s32 %v1014, %v1016
    %v1018 = vrot.slane %v1002, %v1017
    %v1020 = vunpack.c.l.s4 1966171168
    %v1021 = vunpack.c.0.s8 %v1020
    %v1022 = vlaneseq
    %v1023 = vshrl.u32 %v1022, 7
    %v1024 = vsub.s32 %v1021, %v1023
    %v1025 = vrot.slane %v1003, %v1024
    %v1027 = vunpack.c.l.s4 1966171168
    %v1028 = vunpack.c.0.s8 %v1027
    %v1029 = vlaneseq
    %v1030 = vshrl.u32 %v1029, 7
    %v1031 = vsub.s32 %v1028, %v1030
    %v1032 = vrot.slane %v1004, %v1031
    %v1033 = vcombine.high %v1011, %v1011
    %v1034 = vcombine.high %v1018, %v1018
    %v1035 = vcombine.high %v1025, %v1025
    %v1036 = vcombine.high %v1032, %v1032
    %vm1045 = vcmask 253952
    %1046 = vst.msk [vmem:[#allocation2] sm:$0x1] %vm1045, %v1011
    %1047 = vst.msk [vmem:[#allocation2 + $0x2] sm:$0x1] %vm1045, %v1025
    %1048 = vst.msk [vmem:[#allocation2 + $0x4] sm:$0x1] %vm1045, %v1033
    %1049 = vst.msk [vmem:[#allocation2 + $0x6] sm:$0x1] %vm1045, %v1035
    %1050 = vst.msk [vmem:[#allocation2 + $0x8] sm:$0x1] %vm1045, %v1018
    %1051 = vst.msk [vmem:[#allocation2 + $0xa] sm:$0x1] %vm1045, %v1032
    %1052 = vst.msk [vmem:[#allocation2 + $0xc] sm:$0x1] %vm1045, %v1034
    %1053 = vst.msk [vmem:[#allocation2 + $0xe] sm:$0x1] %vm1045, %v1036
    %v1054 = vld [vmem:[%s0 + $0x1] sm:$0x1]
    %v1055 = vld [vmem:[%s0 + $0x3] sm:$0x1]
    %v1056 = vld [vmem:[%s0 + $0x5] sm:$0x1]
    %v1057 = vld [vmem:[%s0 + $0x7] sm:$0x1]
    %v1058 = vld [vmem:[%s0 + $0x9] sm:$0x1]
    %v1059 = vld [vmem:[%s0 + $0xb] sm:$0x1]
    %v1060 = vld [vmem:[%s0 + $0xd] sm:$0x1]
    %v1061 = vld [vmem:[%s0 + $0xf] sm:$0x1]
    %v1070 = vrot.slane %v1055, 7
    %v1071 = vsel %vm61, %v1070, %v1054
    %v1072 = vrot.slane %v1056, 6
    %v1073 = vsel %vm64, %v1072, %v1071
    %v1074 = vrot.slane %v1057, 5
    %v1075 = vsel %vm67, %v1074, %v1073
    %v1076 = vrot.slane %v1058, 4
    %v1077 = vsel %vm70, %v1076, %v1075
    %v1078 = vrot.slane %v1059, 3
    %v1079 = vsel %vm73, %v1078, %v1077
    %v1080 = vrot.slane %v1060, 2
    %v1081 = vsel %vm76, %v1080, %v1079
    %v1082 = vrot.slane %v1061, 1
    %v1083 = vsel %vm79, %v1082, %v1081
    %v1084 = vsel %vm81, %v1083, 0
    %1086 = vmatprep.subr.mxu0 0.0
    %1087 = vmatpush1.msra.mxu0 %v24
    %1088 = vmatprep.subr.mxu0 0.0
    %1089 = vmatpush1.msra.mxu0 %v25
    %1090 = vmatprep.subr.mxu0 0.0
    %1091 = vmatpush1.msra.mxu0 %v26
    %1092 = vmatprep.subr.mxu0 0.0
    %1093 = vmatpush1.msra.mxu0 %v27
    %1094 = vmatprep.subr.mxu0 0.0
    %1095 = vmatpush1.msra.mxu0 0.0
    %1096 = vmatprep.subr.mxu0 0.0
    %1097 = vmatpush1.msra.mxu0 0.0
    %1098 = vmatprep.subr.mxu0 0.0
    %1099 = vmatpush1.msra.mxu0 0.0
    %1100 = vmatprep.subr.mxu0 0.0
    %1101 = vmatpush1.msra.mxu0 0.0
    %1102 = vmatprep.subr.mxu0 0.0
    %1103 = vmatpush1.msra.mxu0 0.0
    %1104 = vmatprep.subr.mxu0 0.0
    %1105 = vmatpush1.msra.mxu0 0.0
    %1106 = vmatprep.subr.mxu0 0.0
    %1107 = vmatpush1.msra.mxu0 0.0
    %1108 = vmatprep.subr.mxu0 0.0
    %1109 = vmatpush1.msra.mxu0 0.0
    %1110 = vmatprep.subr.mxu0 0.0
    %1111 = vmatpush1.msra.mxu0 0.0
    %1112 = vmatprep.subr.mxu0 0.0
    %1113 = vmatpush1.msra.mxu0 0.0
    %1114 = vmatprep.subr.mxu0 0.0
    %1115 = vmatpush1.msra.mxu0 0.0
    %1116 = vmatprep.subr.mxu0 0.0
    %1117 = vmatpush1.msra.mxu0 0.0
    %1118 = vmatprep.subr.mxu0 0.0
    %1119 = vmatpush1.msra.mxu0 0.0
    %1120 = vmatprep.subr.mxu0 0.0
    %1121 = vmatpush1.msra.mxu0 0.0
    %1122 = vmatprep.subr.mxu0 0.0
    %1123 = vmatpush1.msra.mxu0 0.0
    %1124 = vmatprep.subr.mxu0 0.0
    %1125 = vmatpush1.msra.mxu0 0.0
    %1126 = vmatprep.subr.mxu0 0.0
    %1127 = vmatpush1.msra.mxu0 0.0
    %1128 = vmatprep.subr.mxu0 0.0
    %1129 = vmatpush1.msra.mxu0 0.0
    %1130 = vmatprep.subr.mxu0 0.0
    %1131 = vmatpush1.msra.mxu0 0.0
    %1132 = vmatprep.subr.mxu0 0.0
    %1133 = vmatpush1.msra.mxu0 0.0
    %1134 = vmatprep.subr.mxu0 0.0
    %1135 = vmatpush1.msra.mxu0 0.0
    %1136 = vmatprep.subr.mxu0 0.0
    %1137 = vmatpush1.msra.mxu0 0.0
    %1138 = vmatprep.subr.mxu0 0.0
    %1139 = vmatpush1.msra.mxu0 0.0
    %1140 = vmatprep.subr.mxu0 0.0
    %1141 = vmatpush1.msra.mxu0 0.0
    %1142 = vmatprep.subr.mxu0 0.0
    %1143 = vmatpush1.msra.mxu0 0.0
    %1144 = vmatprep.subr.mxu0 0.0
    %1145 = vmatpush1.msra.mxu0 0.0
    %1146 = vmatprep.subr.mxu0 0.0
    %1147 = vmatpush1.msra.mxu0 0.0
    %1148 = vmatprep.subr.mxu0 0.0
    %1149 = vmatpush1.msra.mxu0 0.0
    %1150 = vmatprep.mubr.f32.mxu0 0.0
    %1151 = vmatmul.mubr.f32.gmra.mrb[0].mxu0 %v1084
    %v1152 = vpop.f32.mrb[0].mxu0
    %v1153 = vadd.f32 %v50, %v1152
    %v1154 = vpop.f32.mrb[0].mxu0
    %1155 = vdwg.mxu0
    %v1156 = vmul.f32 %v1153, 0.35355338
    %1158 = vrot.lane.b32.xlu0 %v1153, 96
    %v1159 = vpop.permute.xlu0 %1158
    %v1161 = vsel %vm158, %v1156, 0
    %v1163 = vsel %vm158, %v1159, 0
    %1165 = vmatprep.subr.mxu0 0.0
    %1166 = vmatpush1.xpose.msra.mxu0 %v1163
    %1167 = vmatprep.subr.mxu0 0.0
    %1168 = vmatpush1.xpose.msra.mxu0 0.0
    %1169 = vmatprep.subr.mxu0 0.0
    %1170 = vmatpush1.xpose.msra.mxu0 0.0
    %1171 = vmatprep.subr.mxu0 0.0
    %1172 = vmatpush1.xpose.msra.mxu0 0.0
    %1173 = vmatprep.subr.mxu0 0.0
    %1174 = vmatpush1.xpose.msra.mxu0 0.0
    %1175 = vmatprep.subr.mxu0 0.0
    %1176 = vmatpush1.xpose.msra.mxu0 0.0
    %1177 = vmatprep.subr.mxu0 0.0
    %1178 = vmatpush1.xpose.msra.mxu0 0.0
    %1179 = vmatprep.subr.mxu0 0.0
    %1180 = vmatpush1.xpose.msra.mxu0 0.0
    %1181 = vmatprep.subr.mxu0 0.0
    %1182 = vmatpush1.xpose.msra.mxu0 0.0
    %1183 = vmatprep.subr.mxu0 0.0
    %1184 = vmatpush1.xpose.msra.mxu0 0.0
    %1185 = vmatprep.subr.mxu0 0.0
    %1186 = vmatpush1.xpose.msra.mxu0 0.0
    %1187 = vmatprep.subr.mxu0 0.0
    %1188 = vmatpush1.xpose.msra.mxu0 0.0
    %1189 = vmatprep.subr.mxu0 0.0
    %1190 = vmatpush1.xpose.msra.mxu0 0.0
    %1191 = vmatprep.subr.mxu0 0.0
    %1192 = vmatpush1.xpose.msra.mxu0 0.0
    %1193 = vmatprep.subr.mxu0 0.0
    %1194 = vmatpush1.xpose.msra.mxu0 0.0
    %1195 = vmatprep.subr.mxu0 0.0
    %1196 = vmatpush1.xpose.msra.mxu0 0.0
    %1197 = vmatprep.subr.mxu0 0.0
    %1198 = vmatpush1.xpose.msra.mxu0 0.0
    %1199 = vmatprep.subr.mxu0 0.0
    %1200 = vmatpush1.xpose.msra.mxu0 0.0
    %1201 = vmatprep.subr.mxu0 0.0
    %1202 = vmatpush1.xpose.msra.mxu0 0.0
    %1203 = vmatprep.subr.mxu0 0.0
    %1204 = vmatpush1.xpose.msra.mxu0 0.0
    %1205 = vmatprep.subr.mxu0 0.0
    %1206 = vmatpush1.xpose.msra.mxu0 0.0
    %1207 = vmatprep.subr.mxu0 0.0
    %1208 = vmatpush1.xpose.msra.mxu0 0.0
    %1209 = vmatprep.subr.mxu0 0.0
    %1210 = vmatpush1.xpose.msra.mxu0 0.0
    %1211 = vmatprep.subr.mxu0 0.0
    %1212 = vmatpush1.xpose.msra.mxu0 0.0
    %1213 = vmatprep.subr.mxu0 0.0
    %1214 = vmatpush1.xpose.msra.mxu0 0.0
    %1215 = vmatprep.subr.mxu0 0.0
    %1216 = vmatpush1.xpose.msra.mxu0 0.0
    %1217 = vmatprep.subr.mxu0 0.0
    %1218 = vmatpush1.xpose.msra.mxu0 0.0
    %1219 = vmatprep.subr.mxu0 0.0
    %1220 = vmatpush1.xpose.msra.mxu0 0.0
    %1221 = vmatprep.subr.mxu0 0.0
    %1222 = vmatpush1.xpose.msra.mxu0 0.0
    %1223 = vmatprep.subr.mxu0 0.0
    %1224 = vmatpush1.xpose.msra.mxu0 0.0
    %1225 = vmatprep.subr.mxu0 0.0
    %1226 = vmatpush1.xpose.msra.mxu0 0.0
    %1227 = vmatprep.subr.mxu0 0.0
    %1228 = vmatpush1.xpose.msra.mxu0 0.0
    %1229 = vmatprep.mubr.f32.mxu0 0.0
    %1230 = vmatmul.mubr.f32.gmra.mrb[0].mxu0 %v1161
    %v1231 = vpop.f32.mrb[0].mxu0
    %v1232 = vadd.f32 0.0, %v1231
    %v1233 = vpop.f32.mrb[0].mxu0
    %1234 = vdwg.mxu0
    %v1235 = vsel %vm158, %v1232, -inf
    %1236 = vmax.xlane.f32.xlu0 %v1235
    %v1237 = vpop.xlane.xlu0 %1236
    %v1238 = vsub.f32 %v1232, %v1237
    %v1239 = vmul.f32 %v1238, 1.442695
    %v1240 = vpow.pop %v1239
    %v1241 = vsel %vm158, %v1240, 0.0
    %1242 = vadd.xlane.f32.xlu0 %v1241
    %v1243 = vpop.xlane.xlu0 %1242
    %v1244 = vrcp.pop %v1243
    %v1245 = vmul.f32 %v1240, %v1244
    %1246 = vrot.lane.b32.xlu0 %v1153, 64
    %v1247 = vpop.permute.xlu0 %1246
    %v1250 = vsel %vm158, %v1245, 0
    %1252 = vmatprep.subr.mxu0 0.0
    %1253 = vmatpush1.msra.mxu0 %v1247
    %1254 = vmatprep.subr.mxu0 0.0
    %1255 = vmatpush1.msra.mxu0 0.0
    %1256 = vmatprep.subr.mxu0 0.0
    %1257 = vmatpush1.msra.mxu0 0.0
    %1258 = vmatprep.subr.mxu0 0.0
    %1259 = vmatpush1.msra.mxu0 0.0
    %1260 = vmatprep.subr.mxu0 0.0
    %1261 = vmatpush1.msra.mxu0 0.0
    %1262 = vmatprep.subr.mxu0 0.0
    %1263 = vmatpush1.msra.mxu0 0.0
    %1264 = vmatprep.subr.mxu0 0.0
    %1265 = vmatpush1.msra.mxu0 0.0
    %1266 = vmatprep.subr.mxu0 0.0
    %1267 = vmatpush1.msra.mxu0 0.0
    %1268 = vmatprep.subr.mxu0 0.0
    %1269 = vmatpush1.msra.mxu0 0.0
    %1270 = vmatprep.subr.mxu0 0.0
    %1271 = vmatpush1.msra.mxu0 0.0
    %1272 = vmatprep.subr.mxu0 0.0
    %1273 = vmatpush1.msra.mxu0 0.0
    %1274 = vmatprep.subr.mxu0 0.0
    %1275 = vmatpush1.msra.mxu0 0.0
    %1276 = vmatprep.subr.mxu0 0.0
    %1277 = vmatpush1.msra.mxu0 0.0
    %1278 = vmatprep.subr.mxu0 0.0
    %1279 = vmatpush1.msra.mxu0 0.0
    %1280 = vmatprep.subr.mxu0 0.0
    %1281 = vmatpush1.msra.mxu0 0.0
    %1282 = vmatprep.subr.mxu0 0.0
    %1283 = vmatpush1.msra.mxu0 0.0
    %1284 = vmatprep.subr.mxu0 0.0
    %1285 = vmatpush1.msra.mxu0 0.0
    %1286 = vmatprep.subr.mxu0 0.0
    %1287 = vmatpush1.msra.mxu0 0.0
    %1288 = vmatprep.subr.mxu0 0.0
    %1289 = vmatpush1.msra.mxu0 0.0
    %1290 = vmatprep.subr.mxu0 0.0
    %1291 = vmatpush1.msra.mxu0 0.0
    %1292 = vmatprep.subr.mxu0 0.0
    %1293 = vmatpush1.msra.mxu0 0.0
    %1294 = vmatprep.subr.mxu0 0.0
    %1295 = vmatpush1.msra.mxu0 0.0
    %1296 = vmatprep.subr.mxu0 0.0
    %1297 = vmatpush1.msra.mxu0 0.0
    %1298 = vmatprep.subr.mxu0 0.0
    %1299 = vmatpush1.msra.mxu0 0.0
    %1300 = vmatprep.subr.mxu0 0.0
    %1301 = vmatpush1.msra.mxu0 0.0
    %1302 = vmatprep.subr.mxu0 0.0
    %1303 = vmatpush1.msra.mxu0 0.0
    %1304 = vmatprep.subr.mxu0 0.0
    %1305 = vmatpush1.msra.mxu0 0.0
    %1306 = vmatprep.subr.mxu0 0.0
    %1307 = vmatpush1.msra.mxu0 0.0
    %1308 = vmatprep.subr.mxu0 0.0
    %1309 = vmatpush1.msra.mxu0 0.0
    %1310 = vmatprep.subr.mxu0 0.0
    %1311 = vmatpush1.msra.mxu0 0.0
    %1312 = vmatprep.subr.mxu0 0.0
    %1313 = vmatpush1.msra.mxu0 0.0
    %1314 = vmatprep.subr.mxu0 0.0
    %1315 = vmatpush1.msra.mxu0 0.0
    %1316 = vmatprep.mubr.f32.mxu0 0.0
    %1317 = vmatmul.mubr.f32.gmra.mrb[0].mxu0 %v1250
    %v1318 = vpop.f32.mrb[0].mxu0
    %v1319 = vadd.f32 0.0, %v1318
    %v1320 = vpop.f32.mrb[0].mxu0
    %1321 = vdwg.mxu0
    %1322 = vrot.lane.b32.xlu0 %v1156, 120
    %v1323 = vpop.permute.xlu0 %1322
    %1324 = vrot.lane.b32.xlu0 %v1153, 88
    %v1325 = vpop.permute.xlu0 %1324
    %v1326 = vsel %vm158, %v1323, 0
    %v1328 = vsel %vm158, %v1325, 0
    %1330 = vmatprep.subr.mxu0 0.0
    %1331 = vmatpush1.xpose.msra.mxu0 %v1328
    %1332 = vmatprep.subr.mxu0 0.0
    %1333 = vmatpush1.xpose.msra.mxu0 0.0
    %1334 = vmatprep.subr.mxu0 0.0
    %1335 = vmatpush1.xpose.msra.mxu0 0.0
    %1336 = vmatprep.subr.mxu0 0.0
    %1337 = vmatpush1.xpose.msra.mxu0 0.0
    %1338 = vmatprep.subr.mxu0 0.0
    %1339 = vmatpush1.xpose.msra.mxu0 0.0
    %1340 = vmatprep.subr.mxu0 0.0
    %1341 = vmatpush1.xpose.msra.mxu0 0.0
    %1342 = vmatprep.subr.mxu0 0.0
    %1343 = vmatpush1.xpose.msra.mxu0 0.0
    %1344 = vmatprep.subr.mxu0 0.0
    %1345 = vmatpush1.xpose.msra.mxu0 0.0
    %1346 = vmatprep.subr.mxu0 0.0
    %1347 = vmatpush1.xpose.msra.mxu0 0.0
    %1348 = vmatprep.subr.mxu0 0.0
    %1349 = vmatpush1.xpose.msra.mxu0 0.0
    %1350 = vmatprep.subr.mxu0 0.0
    %1351 = vmatpush1.xpose.msra.mxu0 0.0
    %1352 = vmatprep.subr.mxu0 0.0
    %1353 = vmatpush1.xpose.msra.mxu0 0.0
    %1354 = vmatprep.subr.mxu0 0.0
    %1355 = vmatpush1.xpose.msra.mxu0 0.0
    %1356 = vmatprep.subr.mxu0 0.0
    %1357 = vmatpush1.xpose.msra.mxu0 0.0
    %1358 = vmatprep.subr.mxu0 0.0
    %1359 = vmatpush1.xpose.msra.mxu0 0.0
    %1360 = vmatprep.subr.mxu0 0.0
    %1361 = vmatpush1.xpose.msra.mxu0 0.0
    %1362 = vmatprep.subr.mxu0 0.0
    %1363 = vmatpush1.xpose.msra.mxu0 0.0
    %1364 = vmatprep.subr.mxu0 0.0
    %1365 = vmatpush1.xpose.msra.mxu0 0.0
    %1366 = vmatprep.subr.mxu0 0.0
    %1367 = vmatpush1.xpose.msra.mxu0 0.0
    %1368 = vmatprep.subr.mxu0 0.0
    %1369 = vmatpush1.xpose.msra.mxu0 0.0
    %1370 = vmatprep.subr.mxu0 0.0
    %1371 = vmatpush1.xpose.msra.mxu0 0.0
    %1372 = vmatprep.subr.mxu0 0.0
    %1373 = vmatpush1.xpose.msra.mxu0 0.0
    %1374 = vmatprep.subr.mxu0 0.0
    %1375 = vmatpush1.xpose.msra.mxu0 0.0
    %1376 = vmatprep.subr.mxu0 0.0
    %1377 = vmatpush1.xpose.msra.mxu0 0.0
    %1378 = vmatprep.subr.mxu0 0.0
    %1379 = vmatpush1.xpose.msra.mxu0 0.0
    %1380 = vmatprep.subr.mxu0 0.0
    %1381 = vmatpush1.xpose.msra.mxu0 0.0
    %1382 = vmatprep.subr.mxu0 0.0
    %1383 = vmatpush1.xpose.msra.mxu0 0.0
    %1384 = vmatprep.subr.mxu0 0.0
    %1385 = vmatpush1.xpose.msra.mxu0 0.0
    %1386 = vmatprep.subr.mxu0 0.0
    %1387 = vmatpush1.xpose.msra.mxu0 0.0
    %1388 = vmatprep.subr.mxu0 0.0
    %1389 = vmatpush1.xpose.msra.mxu0 0.0
    %1390 = vmatprep.subr.mxu0 0.0
    %1391 = vmatpush1.xpose.msra.mxu0 0.0
    %1392 = vmatprep.subr.mxu0 0.0
    %1393 = vmatpush1.xpose.msra.mxu0 0.0
    %1394 = vmatprep.mubr.f32.mxu0 0.0
    %1395 = vmatmul.mubr.f32.gmra.mrb[0].mxu0 %v1326
    %v1396 = vpop.f32.mrb[0].mxu0
    %v1397 = vadd.f32 0.0, %v1396
    %v1398 = vpop.f32.mrb[0].mxu0
    %1399 = vdwg.mxu0
    %v1400 = vsel %vm158, %v1397, -inf
    %1401 = vmax.xlane.f32.xlu0 %v1400
    %v1402 = vpop.xlane.xlu0 %1401
    %v1403 = vsub.f32 %v1397, %v1402
    %v1404 = vmul.f32 %v1403, 1.442695
    %v1405 = vpow.pop %v1404
    %v1406 = vsel %vm158, %v1405, 0.0
    %1407 = vadd.xlane.f32.xlu0 %v1406
    %v1408 = vpop.xlane.xlu0 %1407
    %v1409 = vrcp.pop %v1408
    %v1410 = vmul.f32 %v1405, %v1409
    %1411 = vrot.lane.b32.xlu0 %v1153, 56
    %v1412 = vpop.permute.xlu0 %1411
    %v1415 = vsel %vm158, %v1410, 0
    %1417 = vmatprep.subr.mxu0 0.0
    %1418 = vmatpush1.msra.mxu0 %v1412
    %1419 = vmatprep.subr.mxu0 0.0
    %1420 = vmatpush1.msra.mxu0 0.0
    %1421 = vmatprep.subr.mxu0 0.0
    %1422 = vmatpush1.msra.mxu0 0.0
    %1423 = vmatprep.subr.mxu0 0.0
    %1424 = vmatpush1.msra.mxu0 0.0
    %1425 = vmatprep.subr.mxu0 0.0
    %1426 = vmatpush1.msra.mxu0 0.0
    %1427 = vmatprep.subr.mxu0 0.0
    %1428 = vmatpush1.msra.mxu0 0.0
    %1429 = vmatprep.subr.mxu0 0.0
    %1430 = vmatpush1.msra.mxu0 0.0
    %1431 = vmatprep.subr.mxu0 0.0
    %1432 = vmatpush1.msra.mxu0 0.0
    %1433 = vmatprep.subr.mxu0 0.0
    %1434 = vmatpush1.msra.mxu0 0.0
    %1435 = vmatprep.subr.mxu0 0.0
    %1436 = vmatpush1.msra.mxu0 0.0
    %1437 = vmatprep.subr.mxu0 0.0
    %1438 = vmatpush1.msra.mxu0 0.0
    %1439 = vmatprep.subr.mxu0 0.0
    %1440 = vmatpush1.msra.mxu0 0.0
    %1441 = vmatprep.subr.mxu0 0.0
    %1442 = vmatpush1.msra.mxu0 0.0
    %1443 = vmatprep.subr.mxu0 0.0
    %1444 = vmatpush1.msra.mxu0 0.0
    %1445 = vmatprep.subr.mxu0 0.0
    %1446 = vmatpush1.msra.mxu0 0.0
    %1447 = vmatprep.subr.mxu0 0.0
    %1448 = vmatpush1.msra.mxu0 0.0
    %1449 = vmatprep.subr.mxu0 0.0
    %1450 = vmatpush1.msra.mxu0 0.0
    %1451 = vmatprep.subr.mxu0 0.0
    %1452 = vmatpush1.msra.mxu0 0.0
    %1453 = vmatprep.subr.mxu0 0.0
    %1454 = vmatpush1.msra.mxu0 0.0
    %1455 = vmatprep.subr.mxu0 0.0
    %1456 = vmatpush1.msra.mxu0 0.0
    %1457 = vmatprep.subr.mxu0 0.0
    %1458 = vmatpush1.msra.mxu0 0.0
    %1459 = vmatprep.subr.mxu0 0.0
    %1460 = vmatpush1.msra.mxu0 0.0
    %1461 = vmatprep.subr.mxu0 0.0
    %1462 = vmatpush1.msra.mxu0 0.0
    %1463 = vmatprep.subr.mxu0 0.0
    %1464 = vmatpush1.msra.mxu0 0.0
    %1465 = vmatprep.subr.mxu0 0.0
    %1466 = vmatpush1.msra.mxu0 0.0
    %1467 = vmatprep.subr.mxu0 0.0
    %1468 = vmatpush1.msra.mxu0 0.0
    %1469 = vmatprep.subr.mxu0 0.0
    %1470 = vmatpush1.msra.mxu0 0.0
    %1471 = vmatprep.subr.mxu0 0.0
    %1472 = vmatpush1.msra.mxu0 0.0
    %1473 = vmatprep.subr.mxu0 0.0
    %1474 = vmatpush1.msra.mxu0 0.0
    %1475 = vmatprep.subr.mxu0 0.0
    %1476 = vmatpush1.msra.mxu0 0.0
    %1477 = vmatprep.subr.mxu0 0.0
    %1478 = vmatpush1.msra.mxu0 0.0
    %1479 = vmatprep.subr.mxu0 0.0
    %1480 = vmatpush1.msra.mxu0 0.0
    %1481 = vmatprep.mubr.f32.mxu0 0.0
    %1482 = vmatmul.mubr.f32.gmra.mrb[0].mxu0 %v1415
    %v1483 = vpop.f32.mrb[0].mxu0
    %v1484 = vadd.f32 0.0, %v1483
    %v1485 = vpop.f32.mrb[0].mxu0
    %1486 = vdwg.mxu0
    %1487 = vrot.lane.b32.xlu0 %v1156, 112
    %v1488 = vpop.permute.xlu0 %1487
    %1489 = vrot.lane.b32.xlu0 %v1153, 80
    %v1490 = vpop.permute.xlu0 %1489
    %v1491 = vsel %vm158, %v1488, 0
    %v1493 = vsel %vm158, %v1490, 0
    %1495 = vmatprep.subr.mxu0 0.0
    %1496 = vmatpush1.xpose.msra.mxu0 %v1493
    %1497 = vmatprep.subr.mxu0 0.0
    %1498 = vmatpush1.xpose.msra.mxu0 0.0
    %1499 = vmatprep.subr.mxu0 0.0
    %1500 = vmatpush1.xpose.msra.mxu0 0.0
    %1501 = vmatprep.subr.mxu0 0.0
    %1502 = vmatpush1.xpose.msra.mxu0 0.0
    %1503 = vmatprep.subr.mxu0 0.0
    %1504 = vmatpush1.xpose.msra.mxu0 0.0
    %1505 = vmatprep.subr.mxu0 0.0
    %1506 = vmatpush1.xpose.msra.mxu0 0.0
    %1507 = vmatprep.subr.mxu0 0.0
    %1508 = vmatpush1.xpose.msra.mxu0 0.0
    %1509 = vmatprep.subr.mxu0 0.0
    %1510 = vmatpush1.xpose.msra.mxu0 0.0
    %1511 = vmatprep.subr.mxu0 0.0
    %1512 = vmatpush1.xpose.msra.mxu0 0.0
    %1513 = vmatprep.subr.mxu0 0.0
    %1514 = vmatpush1.xpose.msra.mxu0 0.0
    %1515 = vmatprep.subr.mxu0 0.0
    %1516 = vmatpush1.xpose.msra.mxu0 0.0
    %1517 = vmatprep.subr.mxu0 0.0
    %1518 = vmatpush1.xpose.msra.mxu0 0.0
    %1519 = vmatprep.subr.mxu0 0.0
    %1520 = vmatpush1.xpose.msra.mxu0 0.0
    %1521 = vmatprep.subr.mxu0 0.0
    %1522 = vmatpush1.xpose.msra.mxu0 0.0
    %1523 = vmatprep.subr.mxu0 0.0
    %1524 = vmatpush1.xpose.msra.mxu0 0.0
    %1525 = vmatprep.subr.mxu0 0.0
    %1526 = vmatpush1.xpose.msra.mxu0 0.0
    %1527 = vmatprep.subr.mxu0 0.0
    %1528 = vmatpush1.xpose.msra.mxu0 0.0
    %1529 = vmatprep.subr.mxu0 0.0
    %1530 = vmatpush1.xpose.msra.mxu0 0.0
    %1531 = vmatprep.subr.mxu0 0.0
    %1532 = vmatpush1.xpose.msra.mxu0 0.0
    %1533 = vmatprep.subr.mxu0 0.0
    %1534 = vmatpush1.xpose.msra.mxu0 0.0
    %1535 = vmatprep.subr.mxu0 0.0
    %1536 = vmatpush1.xpose.msra.mxu0 0.0
    %1537 = vmatprep.subr.mxu0 0.0
    %1538 = vmatpush1.xpose.msra.mxu0 0.0
    %1539 = vmatprep.subr.mxu0 0.0
    %1540 = vmatpush1.xpose.msra.mxu0 0.0
    %1541 = vmatprep.subr.mxu0 0.0
    %1542 = vmatpush1.xpose.msra.mxu0 0.0
    %1543 = vmatprep.subr.mxu0 0.0
    %1544 = vmatpush1.xpose.msra.mxu0 0.0
    %1545 = vmatprep.subr.mxu0 0.0
    %1546 = vmatpush1.xpose.msra.mxu0 0.0
    %1547 = vmatprep.subr.mxu0 0.0
    %1548 = vmatpush1.xpose.msra.mxu0 0.0
    %1549 = vmatprep.subr.mxu0 0.0
    %1550 = vmatpush1.xpose.msra.mxu0 0.0
    %1551 = vmatprep.subr.mxu0 0.0
    %1552 = vmatpush1.xpose.msra.mxu0 0.0
    %1553 = vmatprep.subr.mxu0 0.0
    %1554 = vmatpush1.xpose.msra.mxu0 0.0
    %1555 = vmatprep.subr.mxu0 0.0
    %1556 = vmatpush1.xpose.msra.mxu0 0.0
    %1557 = vmatprep.subr.mxu0 0.0
    %1558 = vmatpush1.xpose.msra.mxu0 0.0
    %1559 = vmatprep.mubr.f32.mxu0 0.0
    %1560 = vmatmul.mubr.f32.gmra.mrb[0].mxu0 %v1491
    %v1561 = vpop.f32.mrb[0].mxu0
    %v1562 = vadd.f32 0.0, %v1561
    %v1563 = vpop.f32.mrb[0].mxu0
    %1564 = vdwg.mxu0
    %v1565 = vsel %vm158, %v1562, -inf
    %1566 = vmax.xlane.f32.xlu0 %v1565
    %v1567 = vpop.xlane.xlu0 %1566
    %v1568 = vsub.f32 %v1562, %v1567
    %v1569 = vmul.f32 %v1568, 1.442695
    %v1570 = vpow.pop %v1569
    %v1571 = vsel %vm158, %v1570, 0.0
    %1572 = vadd.xlane.f32.xlu0 %v1571
    %v1573 = vpop.xlane.xlu0 %1572
    %v1574 = vrcp.pop %v1573
    %v1575 = vmul.f32 %v1570, %v1574
    %1576 = vrot.lane.b32.xlu0 %v1153, 48
    %v1577 = vpop.permute.xlu0 %1576
    %v1580 = vsel %vm158, %v1575, 0
    %1582 = vmatprep.subr.mxu0 0.0
    %1583 = vmatpush1.msra.mxu0 %v1577
    %1584 = vmatprep.subr.mxu0 0.0
    %1585 = vmatpush1.msra.mxu0 0.0
    %1586 = vmatprep.subr.mxu0 0.0
    %1587 = vmatpush1.msra.mxu0 0.0
    %1588 = vmatprep.subr.mxu0 0.0
    %1589 = vmatpush1.msra.mxu0 0.0
    %1590 = vmatprep.subr.mxu0 0.0
    %1591 = vmatpush1.msra.mxu0 0.0
    %1592 = vmatprep.subr.mxu0 0.0
    %1593 = vmatpush1.msra.mxu0 0.0
    %1594 = vmatprep.subr.mxu0 0.0
    %1595 = vmatpush1.msra.mxu0 0.0
    %1596 = vmatprep.subr.mxu0 0.0
    %1597 = vmatpush1.msra.mxu0 0.0
    %1598 = vmatprep.subr.mxu0 0.0
    %1599 = vmatpush1.msra.mxu0 0.0
    %1600 = vmatprep.subr.mxu0 0.0
    %1601 = vmatpush1.msra.mxu0 0.0
    %1602 = vmatprep.subr.mxu0 0.0
    %1603 = vmatpush1.msra.mxu0 0.0
    %1604 = vmatprep.subr.mxu0 0.0
    %1605 = vmatpush1.msra.mxu0 0.0
    %1606 = vmatprep.subr.mxu0 0.0
    %1607 = vmatpush1.msra.mxu0 0.0
    %1608 = vmatprep.subr.mxu0 0.0
    %1609 = vmatpush1.msra.mxu0 0.0
    %1610 = vmatprep.subr.mxu0 0.0
    %1611 = vmatpush1.msra.mxu0 0.0
    %1612 = vmatprep.subr.mxu0 0.0
    %1613 = vmatpush1.msra.mxu0 0.0
    %1614 = vmatprep.subr.mxu0 0.0
    %1615 = vmatpush1.msra.mxu0 0.0
    %1616 = vmatprep.subr.mxu0 0.0
    %1617 = vmatpush1.msra.mxu0 0.0
    %1618 = vmatprep.subr.mxu0 0.0
    %1619 = vmatpush1.msra.mxu0 0.0
    %1620 = vmatprep.subr.mxu0 0.0
    %1621 = vmatpush1.msra.mxu0 0.0
    %1622 = vmatprep.subr.mxu0 0.0
    %1623 = vmatpush1.msra.mxu0 0.0
    %1624 = vmatprep.subr.mxu0 0.0
    %1625 = vmatpush1.msra.mxu0 0.0
    %1626 = vmatprep.subr.mxu0 0.0
    %1627 = vmatpush1.msra.mxu0 0.0
    %1628 = vmatprep.subr.mxu0 0.0
    %1629 = vmatpush1.msra.mxu0 0.0
    %1630 = vmatprep.subr.mxu0 0.0
    %1631 = vmatpush1.msra.mxu0 0.0
    %1632 = vmatprep.subr.mxu0 0.0
    %1633 = vmatpush1.msra.mxu0 0.0
    %1634 = vmatprep.subr.mxu0 0.0
    %1635 = vmatpush1.msra.mxu0 0.0
    %1636 = vmatprep.subr.mxu0 0.0
    %1637 = vmatpush1.msra.mxu0 0.0
    %1638 = vmatprep.subr.mxu0 0.0
    %1639 = vmatpush1.msra.mxu0 0.0
    %1640 = vmatprep.subr.mxu0 0.0
    %1641 = vmatpush1.msra.mxu0 0.0
    %1642 = vmatprep.subr.mxu0 0.0
    %1643 = vmatpush1.msra.mxu0 0.0
    %1644 = vmatprep.subr.mxu0 0.0
    %1645 = vmatpush1.msra.mxu0 0.0
    %1646 = vmatprep.mubr.f32.mxu0 0.0
    %1647 = vmatmul.mubr.f32.gmra.mrb[0].mxu0 %v1580
    %v1648 = vpop.f32.mrb[0].mxu0
    %v1649 = vadd.f32 0.0, %v1648
    %v1650 = vpop.f32.mrb[0].mxu0
    %1651 = vdwg.mxu0
    %1652 = vrot.lane.b32.xlu0 %v1156, 104
    %v1653 = vpop.permute.xlu0 %1652
    %1654 = vrot.lane.b32.xlu0 %v1153, 72
    %v1655 = vpop.permute.xlu0 %1654
    %v1656 = vsel %vm158, %v1653, 0
    %v1658 = vsel %vm158, %v1655, 0
    %1660 = vmatprep.subr.mxu0 0.0
    %1661 = vmatpush1.xpose.msra.mxu0 %v1658
    %1662 = vmatprep.subr.mxu0 0.0
    %1663 = vmatpush1.xpose.msra.mxu0 0.0
    %1664 = vmatprep.subr.mxu0 0.0
    %1665 = vmatpush1.xpose.msra.mxu0 0.0
    %1666 = vmatprep.subr.mxu0 0.0
    %1667 = vmatpush1.xpose.msra.mxu0 0.0
    %1668 = vmatprep.subr.mxu0 0.0
    %1669 = vmatpush1.xpose.msra.mxu0 0.0
    %1670 = vmatprep.subr.mxu0 0.0
    %1671 = vmatpush1.xpose.msra.mxu0 0.0
    %1672 = vmatprep.subr.mxu0 0.0
    %1673 = vmatpush1.xpose.msra.mxu0 0.0
    %1674 = vmatprep.subr.mxu0 0.0
    %1675 = vmatpush1.xpose.msra.mxu0 0.0
    %1676 = vmatprep.subr.mxu0 0.0
    %1677 = vmatpush1.xpose.msra.mxu0 0.0
    %1678 = vmatprep.subr.mxu0 0.0
    %1679 = vmatpush1.xpose.msra.mxu0 0.0
    %1680 = vmatprep.subr.mxu0 0.0
    %1681 = vmatpush1.xpose.msra.mxu0 0.0
    %1682 = vmatprep.subr.mxu0 0.0
    %1683 = vmatpush1.xpose.msra.mxu0 0.0
    %1684 = vmatprep.subr.mxu0 0.0
    %1685 = vmatpush1.xpose.msra.mxu0 0.0
    %1686 = vmatprep.subr.mxu0 0.0
    %1687 = vmatpush1.xpose.msra.mxu0 0.0
    %1688 = vmatprep.subr.mxu0 0.0
    %1689 = vmatpush1.xpose.msra.mxu0 0.0
    %1690 = vmatprep.subr.mxu0 0.0
    %1691 = vmatpush1.xpose.msra.mxu0 0.0
    %1692 = vmatprep.subr.mxu0 0.0
    %1693 = vmatpush1.xpose.msra.mxu0 0.0
    %1694 = vmatprep.subr.mxu0 0.0
    %1695 = vmatpush1.xpose.msra.mxu0 0.0
    %1696 = vmatprep.subr.mxu0 0.0
    %1697 = vmatpush1.xpose.msra.mxu0 0.0
    %1698 = vmatprep.subr.mxu0 0.0
    %1699 = vmatpush1.xpose.msra.mxu0 0.0
    %1700 = vmatprep.subr.mxu0 0.0
    %1701 = vmatpush1.xpose.msra.mxu0 0.0
    %1702 = vmatprep.subr.mxu0 0.0
    %1703 = vmatpush1.xpose.msra.mxu0 0.0
    %1704 = vmatprep.subr.mxu0 0.0
    %1705 = vmatpush1.xpose.msra.mxu0 0.0
    %1706 = vmatprep.subr.mxu0 0.0
    %1707 = vmatpush1.xpose.msra.mxu0 0.0
    %1708 = vmatprep.subr.mxu0 0.0
    %1709 = vmatpush1.xpose.msra.mxu0 0.0
    %1710 = vmatprep.subr.mxu0 0.0
    %1711 = vmatpush1.xpose.msra.mxu0 0.0
    %1712 = vmatprep.subr.mxu0 0.0
    %1713 = vmatpush1.xpose.msra.mxu0 0.0
    %1714 = vmatprep.subr.mxu0 0.0
    %1715 = vmatpush1.xpose.msra.mxu0 0.0
    %1716 = vmatprep.subr.mxu0 0.0
    %1717 = vmatpush1.xpose.msra.mxu0 0.0
    %1718 = vmatprep.subr.mxu0 0.0
    %1719 = vmatpush1.xpose.msra.mxu0 0.0
    %1720 = vmatprep.subr.mxu0 0.0
    %1721 = vmatpush1.xpose.msra.mxu0 0.0
    %1722 = vmatprep.subr.mxu0 0.0
    %1723 = vmatpush1.xpose.msra.mxu0 0.0
    %1724 = vmatprep.mubr.f32.mxu0 0.0
    %1725 = vmatmul.mubr.f32.gmra.mrb[0].mxu0 %v1656
    %v1726 = vpop.f32.mrb[0].mxu0
    %v1727 = vadd.f32 0.0, %v1726
    %v1728 = vpop.f32.mrb[0].mxu0
    %1729 = vdwg.mxu0
    %v1730 = vsel %vm158, %v1727, -inf
    %1731 = vmax.xlane.f32.xlu0 %v1730
    %v1732 = vpop.xlane.xlu0 %1731
    %v1733 = vsub.f32 %v1727, %v1732
    %v1734 = vmul.f32 %v1733, 1.442695
    %v1735 = vpow.pop %v1734
    %v1736 = vsel %vm158, %v1735, 0.0
    %1737 = vadd.xlane.f32.xlu0 %v1736
    %v1738 = vpop.xlane.xlu0 %1737
    %v1739 = vrcp.pop %v1738
    %v1740 = vmul.f32 %v1735, %v1739
    %1741 = vrot.lane.b32.xlu0 %v1153, 40
    %v1742 = vpop.permute.xlu0 %1741
    %v1745 = vsel %vm158, %v1740, 0
    %1747 = vmatprep.subr.mxu0 0.0
    %1748 = vmatpush1.msra.mxu0 %v1742
    %1749 = vmatprep.subr.mxu0 0.0
    %1750 = vmatpush1.msra.mxu0 0.0
    %1751 = vmatprep.subr.mxu0 0.0
    %1752 = vmatpush1.msra.mxu0 0.0
    %1753 = vmatprep.subr.mxu0 0.0
    %1754 = vmatpush1.msra.mxu0 0.0
    %1755 = vmatprep.subr.mxu0 0.0
    %1756 = vmatpush1.msra.mxu0 0.0
    %1757 = vmatprep.subr.mxu0 0.0
    %1758 = vmatpush1.msra.mxu0 0.0
    %1759 = vmatprep.subr.mxu0 0.0
    %1760 = vmatpush1.msra.mxu0 0.0
    %1761 = vmatprep.subr.mxu0 0.0
    %1762 = vmatpush1.msra.mxu0 0.0
    %1763 = vmatprep.subr.mxu0 0.0
    %1764 = vmatpush1.msra.mxu0 0.0
    %1765 = vmatprep.subr.mxu0 0.0
    %1766 = vmatpush1.msra.mxu0 0.0
    %1767 = vmatprep.subr.mxu0 0.0
    %1768 = vmatpush1.msra.mxu0 0.0
    %1769 = vmatprep.subr.mxu0 0.0
    %1770 = vmatpush1.msra.mxu0 0.0
    %1771 = vmatprep.subr.mxu0 0.0
    %1772 = vmatpush1.msra.mxu0 0.0
    %1773 = vmatprep.subr.mxu0 0.0
    %1774 = vmatpush1.msra.mxu0 0.0
    %1775 = vmatprep.subr.mxu0 0.0
    %1776 = vmatpush1.msra.mxu0 0.0
    %1777 = vmatprep.subr.mxu0 0.0
    %1778 = vmatpush1.msra.mxu0 0.0
    %1779 = vmatprep.subr.mxu0 0.0
    %1780 = vmatpush1.msra.mxu0 0.0
    %1781 = vmatprep.subr.mxu0 0.0
    %1782 = vmatpush1.msra.mxu0 0.0
    %1783 = vmatprep.subr.mxu0 0.0
    %1784 = vmatpush1.msra.mxu0 0.0
    %1785 = vmatprep.subr.mxu0 0.0
    %1786 = vmatpush1.msra.mxu0 0.0
    %1787 = vmatprep.subr.mxu0 0.0
    %1788 = vmatpush1.msra.mxu0 0.0
    %1789 = vmatprep.subr.mxu0 0.0
    %1790 = vmatpush1.msra.mxu0 0.0
    %1791 = vmatprep.subr.mxu0 0.0
    %1792 = vmatpush1.msra.mxu0 0.0
    %1793 = vmatprep.subr.mxu0 0.0
    %1794 = vmatpush1.msra.mxu0 0.0
    %1795 = vmatprep.subr.mxu0 0.0
    %1796 = vmatpush1.msra.mxu0 0.0
    %1797 = vmatprep.subr.mxu0 0.0
    %1798 = vmatpush1.msra.mxu0 0.0
    %1799 = vmatprep.subr.mxu0 0.0
    %1800 = vmatpush1.msra.mxu0 0.0
    %1801 = vmatprep.subr.mxu0 0.0
    %1802 = vmatpush1.msra.mxu0 0.0
    %1803 = vmatprep.subr.mxu0 0.0
    %1804 = vmatpush1.msra.mxu0 0.0
    %1805 = vmatprep.subr.mxu0 0.0
    %1806 = vmatpush1.msra.mxu0 0.0
    %1807 = vmatprep.subr.mxu0 0.0
    %1808 = vmatpush1.msra.mxu0 0.0
    %1809 = vmatprep.subr.mxu0 0.0
    %1810 = vmatpush1.msra.mxu0 0.0
    %1811 = vmatprep.mubr.f32.mxu0 0.0
    %1812 = vmatmul.mubr.f32.gmra.mrb[0].mxu0 %v1745
    %v1813 = vpop.f32.mrb[0].mxu0
    %v1814 = vadd.f32 0.0, %v1813
    %v1815 = vpop.f32.mrb[0].mxu0
    %1816 = vdwg.mxu0
    %1818 = vrot.lane.b32.xlu0 %v1484, 8
    %v1819 = vpop.permute.xlu0 %1818
    %1822 = vrot.lane.b32.xlu0 %v1649, 16
    %v1823 = vpop.permute.xlu0 %1822
    %1826 = vrot.lane.b32.xlu0 %v1814, 24
    %v1827 = vpop.permute.xlu0 %1826
    %v1829 = vsel %vm158, %v1319, %v1819
    %v1830 = vsel %vm829, %v1829, %v1823
    %v1831 = vsel %vm831, %v1830, %v1827
    %v1833 = vsel %vm81, %v1831, 0
    %1835 = vmatprep.subr.mxu0 0.0
    %1836 = vmatpush1.msra.mxu0 %v29
    %1837 = vmatprep.subr.mxu0 0.0
    %1838 = vmatpush1.msra.mxu0 %v30
    %1839 = vmatprep.subr.mxu0 0.0
    %1840 = vmatpush1.msra.mxu0 %v31
    %1841 = vmatprep.subr.mxu0 0.0
    %1842 = vmatpush1.msra.mxu0 %v32
    %1843 = vmatprep.subr.mxu0 0.0
    %1844 = vmatpush1.msra.mxu0 0.0
    %1845 = vmatprep.subr.mxu0 0.0
    %1846 = vmatpush1.msra.mxu0 0.0
    %1847 = vmatprep.subr.mxu0 0.0
    %1848 = vmatpush1.msra.mxu0 0.0
    %1849 = vmatprep.subr.mxu0 0.0
    %1850 = vmatpush1.msra.mxu0 0.0
    %1851 = vmatprep.subr.mxu0 0.0
    %1852 = vmatpush1.msra.mxu0 0.0
    %1853 = vmatprep.subr.mxu0 0.0
    %1854 = vmatpush1.msra.mxu0 0.0
    %1855 = vmatprep.subr.mxu0 0.0
    %1856 = vmatpush1.msra.mxu0 0.0
    %1857 = vmatprep.subr.mxu0 0.0
    %1858 = vmatpush1.msra.mxu0 0.0
    %1859 = vmatprep.subr.mxu0 0.0
    %1860 = vmatpush1.msra.mxu0 0.0
    %1861 = vmatprep.subr.mxu0 0.0
    %1862 = vmatpush1.msra.mxu0 0.0
    %1863 = vmatprep.subr.mxu0 0.0
    %1864 = vmatpush1.msra.mxu0 0.0
    %1865 = vmatprep.subr.mxu0 0.0
    %1866 = vmatpush1.msra.mxu0 0.0
    %1867 = vmatprep.subr.mxu0 0.0
    %1868 = vmatpush1.msra.mxu0 0.0
    %1869 = vmatprep.subr.mxu0 0.0
    %1870 = vmatpush1.msra.mxu0 0.0
    %1871 = vmatprep.subr.mxu0 0.0
    %1872 = vmatpush1.msra.mxu0 0.0
    %1873 = vmatprep.subr.mxu0 0.0
    %1874 = vmatpush1.msra.mxu0 0.0
    %1875 = vmatprep.subr.mxu0 0.0
    %1876 = vmatpush1.msra.mxu0 0.0
    %1877 = vmatprep.subr.mxu0 0.0
    %1878 = vmatpush1.msra.mxu0 0.0
    %1879 = vmatprep.subr.mxu0 0.0
    %1880 = vmatpush1.msra.mxu0 0.0
    %1881 = vmatprep.subr.mxu0 0.0
    %1882 = vmatpush1.msra.mxu0 0.0
    %1883 = vmatprep.subr.mxu0 0.0
    %1884 = vmatpush1.msra.mxu0 0.0
    %1885 = vmatprep.subr.mxu0 0.0
    %1886 = vmatpush1.msra.mxu0 0.0
    %1887 = vmatprep.subr.mxu0 0.0
    %1888 = vmatpush1.msra.mxu0 0.0
    %1889 = vmatprep.subr.mxu0 0.0
    %1890 = vmatpush1.msra.mxu0 0.0
    %1891 = vmatprep.subr.mxu0 0.0
    %1892 = vmatpush1.msra.mxu0 0.0
    %1893 = vmatprep.subr.mxu0 0.0
    %1894 = vmatpush1.msra.mxu0 0.0
    %1895 = vmatprep.subr.mxu0 0.0
    %1896 = vmatpush1.msra.mxu0 0.0
    %1897 = vmatprep.subr.mxu0 0.0
    %1898 = vmatpush1.msra.mxu0 0.0
    %1899 = vmatprep.mubr.f32.mxu0 0.0
    %1900 = vmatmul.mubr.f32.gmra.mrb[0].mxu0 %v1833
    %v1901 = vpop.f32.mrb[0].mxu0
    %v1902 = vadd.f32 %v837, %v1901
    %v1903 = vpop.f32.mrb[0].mxu0
    %1904 = vdwg.mxu0
    %v1906 = vadd.f32 %v1902, %v1083
    %v1908 = vsel %vm81, %v1906, 0
    %1910 = vmatprep.subr.mxu0 0.0
    %1911 = vmatpush1.msra.mxu0 %v34
    %1912 = vmatprep.subr.mxu0 0.0
    %1913 = vmatpush1.msra.mxu0 %v35
    %1914 = vmatprep.subr.mxu0 0.0
    %1915 = vmatpush1.msra.mxu0 %v36
    %1916 = vmatprep.subr.mxu0 0.0
    %1917 = vmatpush1.msra.mxu0 %v37
    %1918 = vmatprep.subr.mxu0 0.0
    %1919 = vmatpush1.msra.mxu0 0.0
    %1920 = vmatprep.subr.mxu0 0.0
    %1921 = vmatpush1.msra.mxu0 0.0
    %1922 = vmatprep.subr.mxu0 0.0
    %1923 = vmatpush1.msra.mxu0 0.0
    %1924 = vmatprep.subr.mxu0 0.0
    %1925 = vmatpush1.msra.mxu0 0.0
    %1926 = vmatprep.subr.mxu0 0.0
    %1927 = vmatpush1.msra.mxu0 0.0
    %1928 = vmatprep.subr.mxu0 0.0
    %1929 = vmatpush1.msra.mxu0 0.0
    %1930 = vmatprep.subr.mxu0 0.0
    %1931 = vmatpush1.msra.mxu0 0.0
    %1932 = vmatprep.subr.mxu0 0.0
    %1933 = vmatpush1.msra.mxu0 0.0
    %1934 = vmatprep.subr.mxu0 0.0
    %1935 = vmatpush1.msra.mxu0 0.0
    %1936 = vmatprep.subr.mxu0 0.0
    %1937 = vmatpush1.msra.mxu0 0.0
    %1938 = vmatprep.subr.mxu0 0.0
    %1939 = vmatpush1.msra.mxu0 0.0
    %1940 = vmatprep.subr.mxu0 0.0
    %1941 = vmatpush1.msra.mxu0 0.0
    %1942 = vmatprep.subr.mxu0 0.0
    %1943 = vmatpush1.msra.mxu0 0.0
    %1944 = vmatprep.subr.mxu0 0.0
    %1945 = vmatpush1.msra.mxu0 0.0
    %1946 = vmatprep.subr.mxu0 0.0
    %1947 = vmatpush1.msra.mxu0 0.0
    %1948 = vmatprep.subr.mxu0 0.0
    %1949 = vmatpush1.msra.mxu0 0.0
    %1950 = vmatprep.subr.mxu0 0.0
    %1951 = vmatpush1.msra.mxu0 0.0
    %1952 = vmatprep.subr.mxu0 0.0
    %1953 = vmatpush1.msra.mxu0 0.0
    %1954 = vmatprep.subr.mxu0 0.0
    %1955 = vmatpush1.msra.mxu0 0.0
    %1956 = vmatprep.subr.mxu0 0.0
    %1957 = vmatpush1.msra.mxu0 0.0
    %1958 = vmatprep.subr.mxu0 0.0
    %1959 = vmatpush1.msra.mxu0 0.0
    %1960 = vmatprep.subr.mxu0 0.0
    %1961 = vmatpush1.msra.mxu0 0.0
    %1962 = vmatprep.subr.mxu0 0.0
    %1963 = vmatpush1.msra.mxu0 0.0
    %1964 = vmatprep.subr.mxu0 0.0
    %1965 = vmatpush1.msra.mxu0 0.0
    %1966 = vmatprep.subr.mxu0 0.0
    %1967 = vmatpush1.msra.mxu0 0.0
    %1968 = vmatprep.subr.mxu0 0.0
    %1969 = vmatpush1.msra.mxu0 0.0
    %1970 = vmatprep.subr.mxu0 0.0
    %1971 = vmatpush1.msra.mxu0 0.0
    %1972 = vmatprep.subr.mxu0 0.0
    %1973 = vmatpush1.msra.mxu0 0.0
    %1974 = vmatprep.mubr.f32.mxu0 0.0
    %1975 = vmatmul.mubr.f32.gmra.mrb[0].mxu0 %v1908
    %v1976 = vpop.f32.mrb[0].mxu0
    %v1977 = vadd.f32 %v1906, %v1976
    %v1978 = vpop.f32.mrb[0].mxu0
    %1979 = vdwg.mxu0
    %v1981 = vcombine.high %v1977, %v1977
    %v1983 = vunpack.c.l.s4 1966171168
    %v1984 = vunpack.c.0.s8 %v1983
    %v1985 = vlaneseq
    %v1986 = vshrl.u32 %v1985, 7
    %v1987 = vsub.s32 %v1984, %v1986
    %v1988 = vrot.slane %v1977, %v1987
    %v1990 = vunpack.c.l.s4 1966171168
    %v1991 = vunpack.c.0.s8 %v1990
    %v1992 = vlaneseq
    %v1993 = vshrl.u32 %v1992, 7
    %v1994 = vsub.s32 %v1991, %v1993
    %v1995 = vrot.slane %v1981, %v1994
    %v1996 = vcombine.high %v1988, %v1988
    %v1997 = vcombine.high %v1995, %v1995
    %v1999 = vunpack.c.l.s4 1966171168
    %v2000 = vunpack.c.0.s8 %v1999
    %v2001 = vlaneseq
    %v2002 = vshrl.u32 %v2001, 7
    %v2003 = vsub.s32 %v2000, %v2002
    %v2004 = vrot.slane %v1988, %v2003
    %v2006 = vunpack.c.l.s4 1966171168
    %v2007 = vunpack.c.0.s8 %v2006
    %v2008 = vlaneseq
    %v2009 = vshrl.u32 %v2008, 7
    %v2010 = vsub.s32 %v2007, %v2009
    %v2011 = vrot.slane %v1995, %v2010
    %v2013 = vunpack.c.l.s4 1966171168
    %v2014 = vunpack.c.0.s8 %v2013
    %v2015 = vlaneseq
    %v2016 = vshrl.u32 %v2015, 7
    %v2017 = vsub.s32 %v2014, %v2016
    %v2018 = vrot.slane %v1996, %v2017
    %v2020 = vunpack.c.l.s4 1966171168
    %v2021 = vunpack.c.0.s8 %v2020
    %v2022 = vlaneseq
    %v2023 = vshrl.u32 %v2022, 7
    %v2024 = vsub.s32 %v2021, %v2023
    %v2025 = vrot.slane %v1997, %v2024
    %v2026 = vcombine.high %v2004, %v2004
    %v2027 = vcombine.high %v2011, %v2011
    %v2028 = vcombine.high %v2018, %v2018
    %v2029 = vcombine.high %v2025, %v2025
    %2038 = vst.msk [vmem:[#allocation2 + $0x1] sm:$0x1] %vm1045, %v2004
    %2039 = vst.msk [vmem:[#allocation2 + $0x3] sm:$0x1] %vm1045, %v2018
    %2040 = vst.msk [vmem:[#allocation2 + $0x5] sm:$0x1] %vm1045, %v2026
    %2041 = vst.msk [vmem:[#allocation2 + $0x7] sm:$0x1] %vm1045, %v2028
    %2042 = vst.msk [vmem:[#allocation2 + $0x9] sm:$0x1] %vm1045, %v2011
    %2043 = vst.msk [vmem:[#allocation2 + $0xb] sm:$0x1] %vm1045, %v2025
    %2044 = vst.msk [vmem:[#allocation2 + $0xd] sm:$0x1] %vm1045, %v2027
    %2045 = vst.msk [vmem:[#allocation2 + $0xf] sm:$0x1] %vm1045, %v2029
    // Predicated region
    $region26: #{transformer_layer_forward.1} parent=1 // pred_check
      _
    $region27: #{transformer_layer_forward.1} parent=1 // pred_check_branch
      %2047 = sbr.rel (0) target = $region29
    $region28: #{transformer_layer_forward.1} parent=1 // pred_region
      %s2049 = ssub.s32 256, 256
      %2050 = vsyncadd [#allocation3], %s2049
      %s2051 = sshll.u32 [#allocation2], 4
      %s2052 = int_to_ptr.vmem [resolvable:$true] %s2051
      %2057 = dma.vmem_to_hbm [thread:$0]  %s2052, 256, %s6, [#allocation3], 32, 32, 2
    $region29: #{transformer_layer_forward.1} parent=1 // pred_fallthru
      _
    // Predicated region
    $region30: #{transformer_layer_forward.1} parent=1 // pred_check
      _
    $region31: #{transformer_layer_forward.1} parent=1 // pred_check_branch
      %2059 = sbr.rel (0) target = $region33
    $region32: #{transformer_layer_forward.1} parent=1 // pred_region
      %2060 = dma.done [#allocation3], 256
    $region33: #{transformer_layer_forward.1} parent=1 // pred_fallthru
      _
    %2061 = vsyncpa [#allocation3], 1

</llo_original>
